<compile_context>
chip_gen: v7x
topology: tpu7x:2x2x1
jax: 0.10.0
libtpu: 0.0.40
codegen_flags: <defaults>
</compile_context>

<pallas_src>
import jax
import jax.numpy as jnp
from jax.experimental import pallas as pl
from jax.experimental.pallas import tpu as pltpu

IN_FEATURES = 784
H1 = 20
H2 = 20
OUT = 10
HPAD = 128  # lane-dense padded hidden / output width


def mlp_kernel(x_ref, w1_ref, w2_ref, w3_ref, bias_ref, o_ref):
    # x_ref:    (TB, 784)   bf16  streamed per grid step
    # w1_ref:   (784, 128)  bf16  resident; cols 20..127 are zero
    # w2_ref:   (128, 128)  f32   resident; only [0:20, 0:20] nonzero
    # w3_ref:   (128, 128)  f32   resident; only [0:20, 0:10] nonzero
    # bias_ref: (8, 128)    f32   rows 0/1/2 = b1 | b2 | b3 (zero-padded)
    # o_ref:    (TB, 128)   f32   cols 10..127 are zero padding
    x = x_ref[...]
    b1 = bias_ref[0:1, :]
    b2 = bias_ref[1:2, :]
    b3 = bias_ref[2:3, :]

    # fc1: bf16 operands, f32 accumulate; sigmoid in f32 (no bf16 EUP on v5e).
    h1 = jnp.dot(x, w1_ref[...], preferred_element_type=jnp.float32) + b1
    h1 = jax.nn.sigmoid(h1)
    # Padded cols of h1 equal sigmoid(0) = 0.5, but w2's padded rows are zero,
    # so they contribute nothing to fc2.

    # fc2 + relu, all f32 (padded cols of h2 = relu(0) = 0).
    h2 = jnp.dot(h1, w2_ref[...], preferred_element_type=jnp.float32) + b2
    h2 = jnp.maximum(h2, 0.0)

    # fc3 straight into the lane-dense padded output slab (pad cols stay 0).
    o_ref[...] = jnp.dot(h2, w3_ref[...], preferred_element_type=jnp.float32) + b3


def make_params(key):
    """Deterministic PyTorch-style init: U(-1/sqrt(fan_in), 1/sqrt(fan_in))."""
    dims = [(IN_FEATURES, H1), (H1, H2), (H2, OUT)]
    params = []
    for fan_in, fan_out in dims:
        kw, kb, key = jax.random.split(key, 3)
        bound = 1.0 / (fan_in ** 0.5)
        w = jax.random.uniform(kw, (fan_in, fan_out), jnp.float32, -bound, bound)
        b = jax.random.uniform(kb, (1, fan_out), jnp.float32, -bound, bound)
        params += [w, b]
    return params


def _round_up(n, m):
    return (n + m - 1) // m * m


def _pad2(a, shape, dtype):
    out = jnp.zeros(shape, dtype)
    return out.at[: a.shape[0], : a.shape[1]].set(a.astype(dtype))


def neural_network_forward(x_nchw, params, *, block_b=1024):
    """x_nchw: (B, 1, 28, 28) float32 -> logits (B, 10) float32."""
    w1, b1, w2, b2, w3, b3 = params
    B = x_nchw.shape[0]
    # torch.flatten(x, 1); cast once so the HBM copy of x is bf16 (halves traffic)
    x = x_nchw.reshape(B, -1).astype(jnp.bfloat16)
    assert x.shape[1] == IN_FEATURES

    # Batch tile: multiple of 128 (MXU row dim), capped so double-buffered
    # x/out tiles + intermediates stay inside the scoped-VMEM default on all chips.
    tb = min(block_b, _round_up(B, 128))
    b_pad = _round_up(B, tb)
    if b_pad != B:
        x = jnp.pad(x, ((0, b_pad - B), (0, 0)))

    # Zero-pad weights to lane-dense widths. Padded rows of w2/w3 are zero, so
    # padded activation columns never leak into the real outputs.
    w1p = _pad2(w1, (IN_FEATURES, HPAD), jnp.bfloat16)
    w2p = _pad2(w2, (HPAD, HPAD), jnp.float32)
    w3p = _pad2(w3, (HPAD, HPAD), jnp.float32)
    bias = jnp.zeros((8, HPAD), jnp.float32)
    bias = bias.at[0, :H1].set(b1.reshape(-1))
    bias = bias.at[1, :H2].set(b2.reshape(-1))
    bias = bias.at[2, :OUT].set(b3.reshape(-1))

    out = pl.pallas_call(
        mlp_kernel,
        out_shape=jax.ShapeDtypeStruct((b_pad, HPAD), jnp.float32),
        grid_spec=pltpu.PrefetchScalarGridSpec(
            num_scalar_prefetch=0,
            grid=(b_pad // tb,),
            in_specs=[
                pl.BlockSpec((tb, IN_FEATURES), lambda i: (i, 0)),    # x tiles (streamed)
                pl.BlockSpec((IN_FEATURES, HPAD), lambda i: (0, 0)),  # w1 resident
                pl.BlockSpec((HPAD, HPAD), lambda i: (0, 0)),         # w2 resident
                pl.BlockSpec((HPAD, HPAD), lambda i: (0, 0)),         # w3 resident
                pl.BlockSpec((8, HPAD), lambda i: (0, 0)),            # biases resident
            ],
            out_specs=pl.BlockSpec((tb, HPAD), lambda i: (i, 0)),
        ),
        compiler_params=pltpu.CompilerParams(
            dimension_semantics=("parallel",),
        ),
    )(x, w1p, w2p, w3p, bias)

    return out[:B, :OUT]


def reference_forward(x_nchw, params):
    w1, b1, w2, b2, w3, b3 = params
    x = x_nchw.reshape(x_nchw.shape[0], -1)
    h1 = jax.nn.sigmoid(x @ w1 + b1)
    h2 = jnp.maximum(h1 @ w2 + b2, 0.0)
    return h2 @ w3 + b3


if __name__ == "__main__":
    key = jax.random.PRNGKey(0)
    kx, kp = jax.random.split(key)

    # Small MNIST-like batch: (B, C, H, W) = (8, 1, 28, 28) -> flatten to 784
    x = jax.random.normal(kx, (8, 1, 28, 28), dtype=jnp.float32)
    params = make_params(kp)

    out = neural_network_forward(x, params)
    out = jax.block_until_ready(out)

    ref = reference_forward(x, params)  # pure-f32 reference
    assert out.shape == (8, 10)
    # fc1 operands are bf16 (f32 accumulate), so tolerance is loosened vs f32 ref
    assert jnp.allclose(out, ref, atol=3e-2, rtol=3e-2), (
        float(jnp.max(jnp.abs(out - ref))))

    print("KERNEL_OK")
</pallas_src>

<mosaic_0001>
module attributes {stable_mosaic.version = 11 : i64} {
  func.func @mlp_kernel(%arg0: i32, %arg1: memref<128x784xbf16, #tpu.memory_space<vmem>>, %arg2: memref<784x128xbf16, #tpu.memory_space<vmem>>, %arg3: memref<128x128xf32, #tpu.memory_space<vmem>>, %arg4: memref<128x128xf32, #tpu.memory_space<vmem>>, %arg5: memref<8x128xf32, #tpu.memory_space<vmem>>, %arg6: memref<128x128xf32, #tpu.memory_space<vmem>>) attributes {dimension_semantics = [#tpu.dimension_semantics<parallel>], iteration_bounds = array<i64: 1>, scalar_prefetch = 0 : i64, scratch_operands = 0 : i64, tpu.core_type = #tpu.core_type<tc>, window_params = [{transform_indices = @transform_0, window_bounds = array<i64: 128, 784>}, {pipeline_mode = #tpu.pipeline_mode<synchronous>, transform_indices = @transform_1, window_bounds = array<i64: 784, 128>}, {pipeline_mode = #tpu.pipeline_mode<synchronous>, transform_indices = @transform_2, window_bounds = array<i64: 128, 128>}, {pipeline_mode = #tpu.pipeline_mode<synchronous>, transform_indices = @transform_3, window_bounds = array<i64: 128, 128>}, {pipeline_mode = #tpu.pipeline_mode<synchronous>, transform_indices = @transform_4, window_bounds = array<i64: 8, 128>}, {transform_indices = @transform_5, window_bounds = array<i64: 128, 128>}]} {
    %c0 = arith.constant 0 : index
    %c0_0 = arith.constant 0 : index
    %0 = vector.load %arg1[%c0, %c0_0] : memref<128x784xbf16, #tpu.memory_space<vmem>>, vector<128x784xbf16>
    %c0_1 = arith.constant 0 : index
    %c0_2 = arith.constant 0 : index
    %1 = vector.load %arg5[%c0_1, %c0_2] : memref<8x128xf32, #tpu.memory_space<vmem>>, vector<1x128xf32>
    %c1 = arith.constant 1 : index
    %c0_3 = arith.constant 0 : index
    %2 = vector.load %arg5[%c1, %c0_3] : memref<8x128xf32, #tpu.memory_space<vmem>>, vector<1x128xf32>
    %c2 = arith.constant 2 : index
    %c0_4 = arith.constant 0 : index
    %3 = vector.load %arg5[%c2, %c0_4] : memref<8x128xf32, #tpu.memory_space<vmem>>, vector<1x128xf32>
    %c0_5 = arith.constant 0 : index
    %c0_6 = arith.constant 0 : index
    %4 = vector.load %arg2[%c0_5, %c0_6] : memref<784x128xbf16, #tpu.memory_space<vmem>>, vector<784x128xbf16>
    %cst = arith.constant dense<0.000000e+00> : vector<128x128xf32>
    %5 = tpu.matmul %0, %4, %cst {dimension_numbers = #tpu.dot_dimension_numbers<[1], [0], [0], [1], [0, 0, 1, 1], [], []>} : vector<128x784xbf16>, vector<784x128xbf16>, vector<128x128xf32> -> vector<128x128xf32>
    %6 = vector.broadcast %1 : vector<1x128xf32> to vector<128x128xf32>
    %7 = arith.addf %5, %6 : vector<128x128xf32>
    %8 = arith.negf %7 : vector<128x128xf32>
    %9 = math.exp %8 : vector<128x128xf32>
    %cst_7 = arith.constant 1.000000e+00 : f32
    %10 = vector.broadcast %cst_7 : f32 to vector<128x128xf32>
    %11 = arith.addf %10, %9 : vector<128x128xf32>
    %12 = arith.divf %10, %11 : vector<128x128xf32>
    %c0_8 = arith.constant 0 : index
    %c0_9 = arith.constant 0 : index
    %13 = vector.load %arg3[%c0_8, %c0_9] : memref<128x128xf32, #tpu.memory_space<vmem>>, vector<128x128xf32>
    %cst_10 = arith.constant dense<0.000000e+00> : vector<128x128xf32>
    %14 = tpu.matmul %12, %13, %cst_10 {dimension_numbers = #tpu.dot_dimension_numbers<[1], [0], [0], [1], [0, 0, 1, 1], [], []>} : vector<128x128xf32>, vector<128x128xf32>, vector<128x128xf32> -> vector<128x128xf32>
    %15 = vector.broadcast %2 : vector<1x128xf32> to vector<128x128xf32>
    %16 = arith.addf %14, %15 : vector<128x128xf32>
    %cst_11 = arith.constant 0.000000e+00 : f32
    %17 = vector.broadcast %cst_11 : f32 to vector<128x128xf32>
    %18 = arith.maximumf %16, %17 : vector<128x128xf32>
    %c0_12 = arith.constant 0 : index
    %c0_13 = arith.constant 0 : index
    %19 = vector.load %arg4[%c0_12, %c0_13] : memref<128x128xf32, #tpu.memory_space<vmem>>, vector<128x128xf32>
    %cst_14 = arith.constant dense<0.000000e+00> : vector<128x128xf32>
    %20 = tpu.matmul %18, %19, %cst_14 {dimension_numbers = #tpu.dot_dimension_numbers<[1], [0], [0], [1], [0, 0, 1, 1], [], []>} : vector<128x128xf32>, vector<128x128xf32>, vector<128x128xf32> -> vector<128x128xf32>
    %21 = vector.broadcast %3 : vector<1x128xf32> to vector<128x128xf32>
    %22 = arith.addf %20, %21 : vector<128x128xf32>
    %c0_15 = arith.constant 0 : index
    %c0_16 = arith.constant 0 : index
    %23 = vector.load %arg6[%c0_15, %c0_16] : memref<128x128xf32, #tpu.memory_space<vmem>>, vector<128x128xf32>
    tpu.vector_store %arg6[%c0_15, %c0_16], %22 {strides = array<i32>} : memref<128x128xf32, #tpu.memory_space<vmem>>, vector<128x128xf32>,
    return
  }
  func.func @transform_0(%arg0: i32) -> (i32, i32) {
    %c0_i32 = arith.constant 0 : i32
    %c0_i32_0 = arith.constant 0 : i32
    return %arg0, %c0_i32 : i32, i32
  }
  func.func @transform_1(%arg0: i32) -> (i32, i32) {
    %c0_i32 = arith.constant 0 : i32
    %c0_i32_0 = arith.constant 0 : i32
    %c0_i32_1 = arith.constant 0 : i32
    return %c0_i32, %c0_i32_0 : i32, i32
  }
  func.func @transform_2(%arg0: i32) -> (i32, i32) {
    %c0_i32 = arith.constant 0 : i32
    %c0_i32_0 = arith.constant 0 : i32
    %c0_i32_1 = arith.constant 0 : i32
    return %c0_i32, %c0_i32_0 : i32, i32
  }
  func.func @transform_3(%arg0: i32) -> (i32, i32) {
    %c0_i32 = arith.constant 0 : i32
    %c0_i32_0 = arith.constant 0 : i32
    %c0_i32_1 = arith.constant 0 : i32
    return %c0_i32, %c0_i32_0 : i32, i32
  }
  func.func @transform_4(%arg0: i32) -> (i32, i32) {
    %c0_i32 = arith.constant 0 : i32
    %c0_i32_0 = arith.constant 0 : i32
    %c0_i32_1 = arith.constant 0 : i32
    return %c0_i32, %c0_i32_0 : i32, i32
  }
  func.func @transform_5(%arg0: i32) -> (i32, i32) {
    %c0_i32 = arith.constant 0 : i32
    %c0_i32_0 = arith.constant 0 : i32
    return %arg0, %c0_i32 : i32, i32
  }
}

</mosaic_0001>

<llo_original>
// kernel: tpu_custom_call.1
$region0: #{tpu_custom_call.1}
  #allocation0 [shape = 'u32[]', space=smem, size = 0x4, offset = 0x4, fixed_abs, tag = 'smem constant byte address 0x4 - core index']
  #allocation1 [shape = 'u32[144,128]{1,0:T(1,128)}', space=vmem, size = 0x12000, scoped, tag = 'internal scratch']
  %s0 = inlined_call_operand.vmem [shape: bf16[128,784], index: 0, kind: input, shape index: {}]
  %s1 = inlined_call_operand.vmem [shape: bf16[784,128], index: 1, kind: input, shape index: {}]
  %s2 = inlined_call_operand.vmem [shape: f32[128,128], index: 2, kind: input, shape index: {}]
  %s3 = inlined_call_operand.vmem [shape: f32[128,128], index: 3, kind: input, shape index: {}]
  %s4 = inlined_call_operand.vmem [shape: f32[8,128], index: 4, kind: input, shape index: {}]
  %s5 = inlined_call_operand.hbm [shape: f32[128,128], index: 5, kind: output, shape index: {}]
  %s6 = sld [smem:[#allocation0]]
  $region30: #{tpu_custom_call.1} parent=0
    _
  %s8 = ssub.s32 1, %s6
  %s9 = scalar_select 0, %s8, %s6
  $region1: #{tpu_custom_call.1} parent=0
    #allocation2 [shape = 'u8[65536]{0}', space=vmem, size = 0x10000, scoped, tag = 'output window, operand 0, single buffered']
    #allocation3 [shape = 's32[1]{0}', space=sflag, size = 0x4, scoped, tag = 'scoped memory for tpu_custom_call.1']
    %10 = vsyncpa [#allocation3], 0
    // Predicated region
    $region2: #{tpu_custom_call.1} parent=1 // pred_check
      _
    $region3: #{tpu_custom_call.1} parent=1 // pred_check_branch
      %12 = sbr.rel (0) target = $region5
    $region4: #{tpu_custom_call.1} parent=1 // pred_region
      _
    $region5: #{tpu_custom_call.1} parent=1 // pred_fallthru
      _
    // Predicated region
    $region6: #{tpu_custom_call.1} parent=1 // pred_check
      _
    $region7: #{tpu_custom_call.1} parent=1 // pred_check_branch
      %14 = sbr.rel (0) target = $region9
    $region8: #{tpu_custom_call.1} parent=1 // pred_region
      _
    $region9: #{tpu_custom_call.1} parent=1 // pred_fallthru
      _
    // Predicated region
    $region10: #{tpu_custom_call.1} parent=1 // pred_check
      _
    $region11: #{tpu_custom_call.1} parent=1 // pred_check_branch
      %16 = sbr.rel (0) target = $region13
    $region12: #{tpu_custom_call.1} parent=1 // pred_region
      _
    $region13: #{tpu_custom_call.1} parent=1 // pred_fallthru
      _
    // Predicated region
    $region14: #{tpu_custom_call.1} parent=1 // pred_check
      _
    $region15: #{tpu_custom_call.1} parent=1 // pred_check_branch
      %18 = sbr.rel (0) target = $region17
    $region16: #{tpu_custom_call.1} parent=1 // pred_region
      _
    $region17: #{tpu_custom_call.1} parent=1 // pred_fallthru
      _
    // Predicated region
    $region18: #{tpu_custom_call.1} parent=1 // pred_check
      _
    $region19: #{tpu_custom_call.1} parent=1 // pred_check_branch
      %20 = sbr.rel (0) target = $region21
    $region20: #{tpu_custom_call.1} parent=1 // pred_region
      _
    $region21: #{tpu_custom_call.1} parent=1 // pred_fallthru
      _
    %v22 = vld [vmem:[%s0] sm:$0xff]
    %v23 = vld [vmem:[%s0 + $0x8] sm:$0xff]
    %v24 = vld [vmem:[%s0 + $0x10] sm:$0xff]
    %v25 = vld [vmem:[%s0 + $0x18] sm:$0xf]
    %v26 = vld [vmem:[%s0 + $0x1c] sm:$0xff]
    %v27 = vld [vmem:[%s0 + $0x24] sm:$0xff]
    %v28 = vld [vmem:[%s0 + $0x2c] sm:$0xff]
    %v29 = vld [vmem:[%s0 + $0x34] sm:$0xf]
    %v30 = vld [vmem:[%s0 + $0x38] sm:$0xff]
    %v31 = vld [vmem:[%s0 + $0x40] sm:$0xff]
    %v32 = vld [vmem:[%s0 + $0x48] sm:$0xff]
    %v33 = vld [vmem:[%s0 + $0x50] sm:$0xf]
    %v34 = vld [vmem:[%s0 + $0x54] sm:$0xff]
    %v35 = vld [vmem:[%s0 + $0x5c] sm:$0xff]
    %v36 = vld [vmem:[%s0 + $0x64] sm:$0xff]
    %v37 = vld [vmem:[%s0 + $0x6c] sm:$0xf]
    %v38 = vld [vmem:[%s0 + $0x70] sm:$0xff]
    %v39 = vld [vmem:[%s0 + $0x78] sm:$0xff]
    %v40 = vld [vmem:[%s0 + $0x80] sm:$0xff]
    %v41 = vld [vmem:[%s0 + $0x88] sm:$0xf]
    %v42 = vld [vmem:[%s0 + $0x8c] sm:$0xff]
    %v43 = vld [vmem:[%s0 + $0x94] sm:$0xff]
    %v44 = vld [vmem:[%s0 + $0x9c] sm:$0xff]
    %v45 = vld [vmem:[%s0 + $0xa4] sm:$0xf]
    %v46 = vld [vmem:[%s0 + $0xa8] sm:$0xff]
    %v47 = vld [vmem:[%s0 + $0xb0] sm:$0xff]
    %v48 = vld [vmem:[%s0 + $0xb8] sm:$0xff]
    %v49 = vld [vmem:[%s0 + $0xc0] sm:$0xf]
    %v50 = vld [vmem:[%s0 + $0xc4] sm:$0xff]
    %v51 = vld [vmem:[%s0 + $0xcc] sm:$0xff]
    %v52 = vld [vmem:[%s0 + $0xd4] sm:$0xff]
    %v53 = vld [vmem:[%s0 + $0xdc] sm:$0xf]
    %v54 = vld [vmem:[%s0 + $0xe0] sm:$0xff]
    %v55 = vld [vmem:[%s0 + $0xe8] sm:$0xff]
    %v56 = vld [vmem:[%s0 + $0xf0] sm:$0xff]
    %v57 = vld [vmem:[%s0 + $0xf8] sm:$0xf]
    %v58 = vld [vmem:[%s0 + $0xfc] sm:$0xff]
    %v59 = vld [vmem:[%s0 + $0x104] sm:$0xff]
    %v60 = vld [vmem:[%s0 + $0x10c] sm:$0xff]
    %v61 = vld [vmem:[%s0 + $0x114] sm:$0xf]
    %v62 = vld [vmem:[%s0 + $0x118] sm:$0xff]
    %v63 = vld [vmem:[%s0 + $0x120] sm:$0xff]
    %v64 = vld [vmem:[%s0 + $0x128] sm:$0xff]
    %v65 = vld [vmem:[%s0 + $0x130] sm:$0xf]
    %v66 = vld [vmem:[%s0 + $0x134] sm:$0xff]
    %v67 = vld [vmem:[%s0 + $0x13c] sm:$0xff]
    %v68 = vld [vmem:[%s0 + $0x144] sm:$0xff]
    %v69 = vld [vmem:[%s0 + $0x14c] sm:$0xf]
    %v70 = vld [vmem:[%s0 + $0x150] sm:$0xff]
    %v71 = vld [vmem:[%s0 + $0x158] sm:$0xff]
    %v72 = vld [vmem:[%s0 + $0x160] sm:$0xff]
    %v73 = vld [vmem:[%s0 + $0x168] sm:$0xf]
    %v74 = vld [vmem:[%s0 + $0x16c] sm:$0xff]
    %v75 = vld [vmem:[%s0 + $0x174] sm:$0xff]
    %v76 = vld [vmem:[%s0 + $0x17c] sm:$0xff]
    %v77 = vld [vmem:[%s0 + $0x184] sm:$0xf]
    %v78 = vld [vmem:[%s0 + $0x188] sm:$0xff]
    %v79 = vld [vmem:[%s0 + $0x190] sm:$0xff]
    %v80 = vld [vmem:[%s0 + $0x198] sm:$0xff]
    %v81 = vld [vmem:[%s0 + $0x1a0] sm:$0xf]
    %v82 = vld [vmem:[%s0 + $0x1a4] sm:$0xff]
    %v83 = vld [vmem:[%s0 + $0x1ac] sm:$0xff]
    %v84 = vld [vmem:[%s0 + $0x1b4] sm:$0xff]
    %v85 = vld [vmem:[%s0 + $0x1bc] sm:$0xf]
    %v86 = vld [vmem:[%s4] sm:$0x1]
    %v87 = vld [vmem:[%s4 + $0x1] sm:$0x1]
    %v88 = vld [vmem:[%s4 + $0x2] sm:$0x1]
    %v89 = vld [vmem:[%s1] sm:$0xf]
    %v90 = vld [vmem:[%s1 + $0x4] sm:$0xf]
    %v91 = vld [vmem:[%s1 + $0x8] sm:$0xf]
    %v92 = vld [vmem:[%s1 + $0xc] sm:$0xf]
    %v93 = vld [vmem:[%s1 + $0x10] sm:$0xf]
    %v94 = vld [vmem:[%s1 + $0x14] sm:$0xf]
    %v95 = vld [vmem:[%s1 + $0x18] sm:$0xf]
    %v96 = vld [vmem:[%s1 + $0x1c] sm:$0xf]
    %v97 = vld [vmem:[%s1 + $0x20] sm:$0xf]
    %v98 = vld [vmem:[%s1 + $0x24] sm:$0xf]
    %v99 = vld [vmem:[%s1 + $0x28] sm:$0xf]
    %v100 = vld [vmem:[%s1 + $0x2c] sm:$0xf]
    %v101 = vld [vmem:[%s1 + $0x30] sm:$0xf]
    %v102 = vld [vmem:[%s1 + $0x34] sm:$0xf]
    %v103 = vld [vmem:[%s1 + $0x38] sm:$0xf]
    %v104 = vld [vmem:[%s1 + $0x3c] sm:$0xf]
    %v105 = vld [vmem:[%s1 + $0x40] sm:$0xf]
    %v106 = vld [vmem:[%s1 + $0x44] sm:$0xf]
    %v107 = vld [vmem:[%s1 + $0x48] sm:$0xf]
    %v108 = vld [vmem:[%s1 + $0x4c] sm:$0xf]
    %v109 = vld [vmem:[%s1 + $0x50] sm:$0xf]
    %v110 = vld [vmem:[%s1 + $0x54] sm:$0xf]
    %v111 = vld [vmem:[%s1 + $0x58] sm:$0xf]
    %v112 = vld [vmem:[%s1 + $0x5c] sm:$0xf]
    %v113 = vld [vmem:[%s1 + $0x60] sm:$0xf]
    %v114 = vld [vmem:[%s1 + $0x64] sm:$0xf]
    %v115 = vld [vmem:[%s1 + $0x68] sm:$0xf]
    %v116 = vld [vmem:[%s1 + $0x6c] sm:$0xf]
    %v117 = vld [vmem:[%s1 + $0x70] sm:$0xf]
    %v118 = vld [vmem:[%s1 + $0x74] sm:$0xf]
    %v119 = vld [vmem:[%s1 + $0x78] sm:$0xf]
    %v120 = vld [vmem:[%s1 + $0x7c] sm:$0xf]
    %v121 = vld [vmem:[%s1 + $0x80] sm:$0xf]
    %v122 = vld [vmem:[%s1 + $0x84] sm:$0xf]
    %v123 = vld [vmem:[%s1 + $0x88] sm:$0xf]
    %v124 = vld [vmem:[%s1 + $0x8c] sm:$0xf]
    %v125 = vld [vmem:[%s1 + $0x90] sm:$0xf]
    %v126 = vld [vmem:[%s1 + $0x94] sm:$0xf]
    %v127 = vld [vmem:[%s1 + $0x98] sm:$0xf]
    %v128 = vld [vmem:[%s1 + $0x9c] sm:$0xf]
    %v129 = vld [vmem:[%s1 + $0xa0] sm:$0xf]
    %v130 = vld [vmem:[%s1 + $0xa4] sm:$0xf]
    %v131 = vld [vmem:[%s1 + $0xa8] sm:$0xf]
    %v132 = vld [vmem:[%s1 + $0xac] sm:$0xf]
    %v133 = vld [vmem:[%s1 + $0xb0] sm:$0xf]
    %v134 = vld [vmem:[%s1 + $0xb4] sm:$0xf]
    %v135 = vld [vmem:[%s1 + $0xb8] sm:$0xf]
    %v136 = vld [vmem:[%s1 + $0xbc] sm:$0xf]
    %v137 = vld [vmem:[%s1 + $0xc0] sm:$0xf]
    %v138 = vld [vmem:[%s1 + $0xc4] sm:$0xf]
    %v139 = vld [vmem:[%s1 + $0xc8] sm:$0xf]
    %v140 = vld [vmem:[%s1 + $0xcc] sm:$0xf]
    %v141 = vld [vmem:[%s1 + $0xd0] sm:$0xf]
    %v142 = vld [vmem:[%s1 + $0xd4] sm:$0xf]
    %v143 = vld [vmem:[%s1 + $0xd8] sm:$0xf]
    %v144 = vld [vmem:[%s1 + $0xdc] sm:$0xf]
    %v145 = vld [vmem:[%s1 + $0xe0] sm:$0xf]
    %v146 = vld [vmem:[%s1 + $0xe4] sm:$0xf]
    %v147 = vld [vmem:[%s1 + $0xe8] sm:$0xf]
    %v148 = vld [vmem:[%s1 + $0xec] sm:$0xf]
    %v149 = vld [vmem:[%s1 + $0xf0] sm:$0xf]
    %v150 = vld [vmem:[%s1 + $0xf4] sm:$0xf]
    %v151 = vld [vmem:[%s1 + $0xf8] sm:$0xf]
    %v152 = vld [vmem:[%s1 + $0xfc] sm:$0xf]
    %v153 = vld [vmem:[%s1 + $0x100] sm:$0xf]
    %v154 = vld [vmem:[%s1 + $0x104] sm:$0xf]
    %v155 = vld [vmem:[%s1 + $0x108] sm:$0xf]
    %v156 = vld [vmem:[%s1 + $0x10c] sm:$0xf]
    %v157 = vld [vmem:[%s1 + $0x110] sm:$0xf]
    %v158 = vld [vmem:[%s1 + $0x114] sm:$0xf]
    %v159 = vld [vmem:[%s1 + $0x118] sm:$0xf]
    %v160 = vld [vmem:[%s1 + $0x11c] sm:$0xf]
    %v161 = vld [vmem:[%s1 + $0x120] sm:$0xf]
    %v162 = vld [vmem:[%s1 + $0x124] sm:$0xf]
    %v163 = vld [vmem:[%s1 + $0x128] sm:$0xf]
    %v164 = vld [vmem:[%s1 + $0x12c] sm:$0xf]
    %v165 = vld [vmem:[%s1 + $0x130] sm:$0xf]
    %v166 = vld [vmem:[%s1 + $0x134] sm:$0xf]
    %v167 = vld [vmem:[%s1 + $0x138] sm:$0xf]
    %v168 = vld [vmem:[%s1 + $0x13c] sm:$0xf]
    %v169 = vld [vmem:[%s1 + $0x140] sm:$0xf]
    %v170 = vld [vmem:[%s1 + $0x144] sm:$0xf]
    %v171 = vld [vmem:[%s1 + $0x148] sm:$0xf]
    %v172 = vld [vmem:[%s1 + $0x14c] sm:$0xf]
    %v173 = vld [vmem:[%s1 + $0x150] sm:$0xf]
    %v174 = vld [vmem:[%s1 + $0x154] sm:$0xf]
    %v175 = vld [vmem:[%s1 + $0x158] sm:$0xf]
    %v176 = vld [vmem:[%s1 + $0x15c] sm:$0xf]
    %v177 = vld [vmem:[%s1 + $0x160] sm:$0xf]
    %v178 = vld [vmem:[%s1 + $0x164] sm:$0xf]
    %v179 = vld [vmem:[%s1 + $0x168] sm:$0xf]
    %v180 = vld [vmem:[%s1 + $0x16c] sm:$0xf]
    %v181 = vld [vmem:[%s1 + $0x170] sm:$0xf]
    %v182 = vld [vmem:[%s1 + $0x174] sm:$0xf]
    %v183 = vld [vmem:[%s1 + $0x178] sm:$0xf]
    %v184 = vld [vmem:[%s1 + $0x17c] sm:$0xf]
    %v185 = vld [vmem:[%s1 + $0x180] sm:$0xf]
    %v186 = vld [vmem:[%s1 + $0x184] sm:$0xf]
    %v187 = vlaneseq
    %v188 = vshrl.u32 %v187, 7
    %v189 = vsub.s32 0, %v188
    %v190 = vrot.slane %v86, %v189
    %v255 = vunpack.c.l.b16 %v22
    %v256 = vunpack.c.h.b16 %v22
    %v257 = vunpack.c.l.b16 %v23
    %v258 = vunpack.c.h.b16 %v23
    %v259 = vunpack.c.l.b16 %v24
    %v260 = vunpack.c.h.b16 %v24
    %v261 = vunpack.c.l.b16 %v25
    %v262 = vunpack.c.l.b16 %v26
    %v263 = vunpack.c.h.b16 %v26
    %v264 = vunpack.c.l.b16 %v27
    %v265 = vunpack.c.h.b16 %v27
    %v266 = vunpack.c.l.b16 %v28
    %v267 = vunpack.c.h.b16 %v28
    %v268 = vunpack.c.l.b16 %v29
    %v269 = vunpack.c.l.b16 %v30
    %v270 = vunpack.c.h.b16 %v30
    %v271 = vunpack.c.l.b16 %v31
    %v272 = vunpack.c.h.b16 %v31
    %v273 = vunpack.c.l.b16 %v32
    %v274 = vunpack.c.h.b16 %v32
    %v275 = vunpack.c.l.b16 %v33
    %v276 = vunpack.c.l.b16 %v34
    %v277 = vunpack.c.h.b16 %v34
    %v278 = vunpack.c.l.b16 %v35
    %v279 = vunpack.c.h.b16 %v35
    %v280 = vunpack.c.l.b16 %v36
    %v281 = vunpack.c.h.b16 %v36
    %v282 = vunpack.c.l.b16 %v37
    %v283 = vunpack.c.l.b16 %v38
    %v284 = vunpack.c.h.b16 %v38
    %v285 = vunpack.c.l.b16 %v39
    %v286 = vunpack.c.h.b16 %v39
    %v287 = vunpack.c.l.b16 %v40
    %v288 = vunpack.c.h.b16 %v40
    %v289 = vunpack.c.l.b16 %v41
    %v290 = vunpack.c.l.b16 %v42
    %v291 = vunpack.c.h.b16 %v42
    %v292 = vunpack.c.l.b16 %v43
    %v293 = vunpack.c.h.b16 %v43
    %v294 = vunpack.c.l.b16 %v44
    %v295 = vunpack.c.h.b16 %v44
    %v296 = vunpack.c.l.b16 %v45
    %v297 = vunpack.c.l.b16 %v46
    %v298 = vunpack.c.h.b16 %v46
    %v299 = vunpack.c.l.b16 %v47
    %v300 = vunpack.c.h.b16 %v47
    %v301 = vunpack.c.l.b16 %v48
    %v302 = vunpack.c.h.b16 %v48
    %v303 = vunpack.c.l.b16 %v49
    %v304 = vunpack.c.l.b16 %v50
    %v305 = vunpack.c.h.b16 %v50
    %v306 = vunpack.c.l.b16 %v51
    %v307 = vunpack.c.h.b16 %v51
    %v308 = vunpack.c.l.b16 %v52
    %v309 = vunpack.c.h.b16 %v52
    %v310 = vunpack.c.l.b16 %v53
    %v311 = vunpack.c.l.b16 %v54
    %v312 = vunpack.c.h.b16 %v54
    %v313 = vunpack.c.l.b16 %v55
    %v314 = vunpack.c.h.b16 %v55
    %v315 = vunpack.c.l.b16 %v56
    %v316 = vunpack.c.h.b16 %v56
    %v317 = vunpack.c.l.b16 %v57
    %v318 = vunpack.c.l.b16 %v58
    %v319 = vunpack.c.h.b16 %v58
    %v320 = vunpack.c.l.b16 %v59
    %v321 = vunpack.c.h.b16 %v59
    %v322 = vunpack.c.l.b16 %v60
    %v323 = vunpack.c.h.b16 %v60
    %v324 = vunpack.c.l.b16 %v61
    %v325 = vunpack.c.l.b16 %v62
    %v326 = vunpack.c.h.b16 %v62
    %v327 = vunpack.c.l.b16 %v63
    %v328 = vunpack.c.h.b16 %v63
    %v329 = vunpack.c.l.b16 %v64
    %v330 = vunpack.c.h.b16 %v64
    %v331 = vunpack.c.l.b16 %v65
    %v332 = vunpack.c.l.b16 %v66
    %v333 = vunpack.c.h.b16 %v66
    %v334 = vunpack.c.l.b16 %v67
    %v335 = vunpack.c.h.b16 %v67
    %v336 = vunpack.c.l.b16 %v68
    %v337 = vunpack.c.h.b16 %v68
    %v338 = vunpack.c.l.b16 %v69
    %v339 = vunpack.c.l.b16 %v70
    %v340 = vunpack.c.h.b16 %v70
    %v341 = vunpack.c.l.b16 %v71
    %v342 = vunpack.c.h.b16 %v71
    %v343 = vunpack.c.l.b16 %v72
    %v344 = vunpack.c.h.b16 %v72
    %v345 = vunpack.c.l.b16 %v73
    %v346 = vunpack.c.l.b16 %v74
    %v347 = vunpack.c.h.b16 %v74
    %v348 = vunpack.c.l.b16 %v75
    %v349 = vunpack.c.h.b16 %v75
    %v350 = vunpack.c.l.b16 %v76
    %v351 = vunpack.c.h.b16 %v76
    %v352 = vunpack.c.l.b16 %v77
    %v353 = vunpack.c.l.b16 %v78
    %v354 = vunpack.c.h.b16 %v78
    %v355 = vunpack.c.l.b16 %v79
    %v356 = vunpack.c.h.b16 %v79
    %v357 = vunpack.c.l.b16 %v80
    %v358 = vunpack.c.h.b16 %v80
    %v359 = vunpack.c.l.b16 %v81
    %v360 = vunpack.c.l.b16 %v82
    %v361 = vunpack.c.h.b16 %v82
    %v362 = vunpack.c.l.b16 %v83
    %v363 = vunpack.c.h.b16 %v83
    %v364 = vunpack.c.l.b16 %v84
    %v365 = vunpack.c.h.b16 %v84
    %v366 = vunpack.c.l.b16 %v85
    %v367 = vpack.c.b16 %v262, %v255
    %v368 = vpack.c.b16 %v263, %v256
    %v369 = vpack.c.b16 %v264, %v257
    %v370 = vpack.c.b16 %v265, %v258
    %v371 = vpack.c.b16 %v266, %v259
    %v372 = vpack.c.b16 %v267, %v260
    %v373 = vpack.c.b16 %v268, %v261
    %v374 = vpack.c.b16 %v276, %v269
    %v375 = vpack.c.b16 %v277, %v270
    %v376 = vpack.c.b16 %v278, %v271
    %v377 = vpack.c.b16 %v279, %v272
    %v378 = vpack.c.b16 %v280, %v273
    %v379 = vpack.c.b16 %v281, %v274
    %v380 = vpack.c.b16 %v282, %v275
    %v381 = vpack.c.b16 %v290, %v283
    %v382 = vpack.c.b16 %v291, %v284
    %v383 = vpack.c.b16 %v292, %v285
    %v384 = vpack.c.b16 %v293, %v286
    %v385 = vpack.c.b16 %v294, %v287
    %v386 = vpack.c.b16 %v295, %v288
    %v387 = vpack.c.b16 %v296, %v289
    %v388 = vpack.c.b16 %v304, %v297
    %v389 = vpack.c.b16 %v305, %v298
    %v390 = vpack.c.b16 %v306, %v299
    %v391 = vpack.c.b16 %v307, %v300
    %v392 = vpack.c.b16 %v308, %v301
    %v393 = vpack.c.b16 %v309, %v302
    %v394 = vpack.c.b16 %v310, %v303
    %v395 = vpack.c.b16 %v318, %v311
    %v396 = vpack.c.b16 %v319, %v312
    %v397 = vpack.c.b16 %v320, %v313
    %v398 = vpack.c.b16 %v321, %v314
    %v399 = vpack.c.b16 %v322, %v315
    %v400 = vpack.c.b16 %v323, %v316
    %v401 = vpack.c.b16 %v324, %v317
    %v402 = vpack.c.b16 %v332, %v325
    %v403 = vpack.c.b16 %v333, %v326
    %v404 = vpack.c.b16 %v334, %v327
    %v405 = vpack.c.b16 %v335, %v328
    %v406 = vpack.c.b16 %v336, %v329
    %v407 = vpack.c.b16 %v337, %v330
    %v408 = vpack.c.b16 %v338, %v331
    %v409 = vpack.c.b16 %v346, %v339
    %v410 = vpack.c.b16 %v347, %v340
    %v411 = vpack.c.b16 %v348, %v341
    %v412 = vpack.c.b16 %v349, %v342
    %v413 = vpack.c.b16 %v350, %v343
    %v414 = vpack.c.b16 %v351, %v344
    %v415 = vpack.c.b16 %v352, %v345
    %v416 = vpack.c.b16 %v360, %v353
    %v417 = vpack.c.b16 %v361, %v354
    %v418 = vpack.c.b16 %v362, %v355
    %v419 = vpack.c.b16 %v363, %v356
    %v420 = vpack.c.b16 %v364, %v357
    %v421 = vpack.c.b16 %v365, %v358
    %v422 = vpack.c.b16 %v366, %v359
    %v569 = vunpack.c.l.b16 %v89
    %v570 = vunpack.c.l.b16 %v90
    %v571 = vunpack.c.l.b16 %v91
    %v572 = vunpack.c.l.b16 %v92
    %v573 = vunpack.c.l.b16 %v93
    %v574 = vunpack.c.l.b16 %v94
    %v575 = vunpack.c.l.b16 %v95
    %v576 = vunpack.c.l.b16 %v96
    %v577 = vunpack.c.l.b16 %v97
    %v578 = vunpack.c.l.b16 %v98
    %v579 = vunpack.c.l.b16 %v99
    %v580 = vunpack.c.l.b16 %v100
    %v581 = vunpack.c.l.b16 %v101
    %v582 = vunpack.c.l.b16 %v102
    %v583 = vunpack.c.l.b16 %v103
    %v584 = vunpack.c.l.b16 %v104
    %v585 = vunpack.c.l.b16 %v105
    %v586 = vunpack.c.l.b16 %v106
    %v587 = vunpack.c.l.b16 %v107
    %v588 = vunpack.c.l.b16 %v108
    %v589 = vunpack.c.l.b16 %v109
    %v590 = vunpack.c.l.b16 %v110
    %v591 = vunpack.c.l.b16 %v111
    %v592 = vunpack.c.l.b16 %v112
    %v593 = vunpack.c.l.b16 %v113
    %v594 = vunpack.c.l.b16 %v114
    %v595 = vunpack.c.l.b16 %v115
    %v596 = vunpack.c.l.b16 %v116
    %v597 = vunpack.c.l.b16 %v117
    %v598 = vunpack.c.l.b16 %v118
    %v599 = vunpack.c.l.b16 %v119
    %v600 = vunpack.c.l.b16 %v120
    %v601 = vunpack.c.l.b16 %v121
    %v602 = vunpack.c.l.b16 %v122
    %v603 = vunpack.c.l.b16 %v123
    %v604 = vunpack.c.l.b16 %v124
    %v605 = vunpack.c.l.b16 %v125
    %v606 = vunpack.c.l.b16 %v126
    %v607 = vunpack.c.l.b16 %v127
    %v608 = vunpack.c.l.b16 %v128
    %v609 = vunpack.c.l.b16 %v129
    %v610 = vunpack.c.l.b16 %v130
    %v611 = vunpack.c.l.b16 %v131
    %v612 = vunpack.c.l.b16 %v132
    %v613 = vunpack.c.l.b16 %v133
    %v614 = vunpack.c.l.b16 %v134
    %v615 = vunpack.c.l.b16 %v135
    %v616 = vunpack.c.l.b16 %v136
    %v617 = vunpack.c.l.b16 %v137
    %v618 = vunpack.c.l.b16 %v138
    %v619 = vunpack.c.l.b16 %v139
    %v620 = vunpack.c.l.b16 %v140
    %v621 = vunpack.c.l.b16 %v141
    %v622 = vunpack.c.l.b16 %v142
    %v623 = vunpack.c.l.b16 %v143
    %v624 = vunpack.c.l.b16 %v144
    %v625 = vunpack.c.l.b16 %v145
    %v626 = vunpack.c.l.b16 %v146
    %v627 = vunpack.c.l.b16 %v147
    %v628 = vunpack.c.l.b16 %v148
    %v629 = vunpack.c.l.b16 %v149
    %v630 = vunpack.c.l.b16 %v150
    %v631 = vunpack.c.l.b16 %v151
    %v632 = vunpack.c.l.b16 %v152
    %v633 = vunpack.c.l.b16 %v153
    %v634 = vunpack.c.l.b16 %v154
    %v635 = vunpack.c.l.b16 %v155
    %v636 = vunpack.c.l.b16 %v156
    %v637 = vunpack.c.l.b16 %v157
    %v638 = vunpack.c.l.b16 %v158
    %v639 = vunpack.c.l.b16 %v159
    %v640 = vunpack.c.l.b16 %v160
    %v641 = vunpack.c.l.b16 %v161
    %v642 = vunpack.c.l.b16 %v162
    %v643 = vunpack.c.l.b16 %v163
    %v644 = vunpack.c.l.b16 %v164
    %v645 = vunpack.c.l.b16 %v165
    %v646 = vunpack.c.l.b16 %v166
    %v647 = vunpack.c.l.b16 %v167
    %v648 = vunpack.c.l.b16 %v168
    %v649 = vunpack.c.l.b16 %v169
    %v650 = vunpack.c.l.b16 %v170
    %v651 = vunpack.c.l.b16 %v171
    %v652 = vunpack.c.l.b16 %v172
    %v653 = vunpack.c.l.b16 %v173
    %v654 = vunpack.c.l.b16 %v174
    %v655 = vunpack.c.l.b16 %v175
    %v656 = vunpack.c.l.b16 %v176
    %v657 = vunpack.c.l.b16 %v177
    %v658 = vunpack.c.l.b16 %v178
    %v659 = vunpack.c.l.b16 %v179
    %v660 = vunpack.c.l.b16 %v180
    %v661 = vunpack.c.l.b16 %v181
    %v662 = vunpack.c.l.b16 %v182
    %v663 = vunpack.c.l.b16 %v183
    %v664 = vunpack.c.l.b16 %v184
    %v665 = vunpack.c.l.b16 %v185
    %v666 = vunpack.c.l.b16 %v186
    %v667 = vpack.c.b16 %v570, %v569
    %v668 = vpack.c.b16 %v572, %v571
    %v669 = vpack.c.b16 %v574, %v573
    %v670 = vpack.c.b16 %v576, %v575
    %v671 = vpack.c.b16 %v578, %v577
    %v672 = vpack.c.b16 %v580, %v579
    %v673 = vpack.c.b16 %v582, %v581
    %v674 = vpack.c.b16 %v584, %v583
    %v675 = vpack.c.b16 %v586, %v585
    %v676 = vpack.c.b16 %v588, %v587
    %v677 = vpack.c.b16 %v590, %v589
    %v678 = vpack.c.b16 %v592, %v591
    %v679 = vpack.c.b16 %v594, %v593
    %v680 = vpack.c.b16 %v596, %v595
    %v681 = vpack.c.b16 %v598, %v597
    %v682 = vpack.c.b16 %v600, %v599
    %v683 = vpack.c.b16 %v602, %v601
    %v684 = vpack.c.b16 %v604, %v603
    %v685 = vpack.c.b16 %v606, %v605
    %v686 = vpack.c.b16 %v608, %v607
    %v687 = vpack.c.b16 %v610, %v609
    %v688 = vpack.c.b16 %v612, %v611
    %v689 = vpack.c.b16 %v614, %v613
    %v690 = vpack.c.b16 %v616, %v615
    %v691 = vpack.c.b16 %v618, %v617
    %v692 = vpack.c.b16 %v620, %v619
    %v693 = vpack.c.b16 %v622, %v621
    %v694 = vpack.c.b16 %v624, %v623
    %v695 = vpack.c.b16 %v626, %v625
    %v696 = vpack.c.b16 %v628, %v627
    %v697 = vpack.c.b16 %v630, %v629
    %v698 = vpack.c.b16 %v632, %v631
    %v699 = vpack.c.b16 %v634, %v633
    %v700 = vpack.c.b16 %v636, %v635
    %v701 = vpack.c.b16 %v638, %v637
    %v702 = vpack.c.b16 %v640, %v639
    %v703 = vpack.c.b16 %v642, %v641
    %v704 = vpack.c.b16 %v644, %v643
    %v705 = vpack.c.b16 %v646, %v645
    %v706 = vpack.c.b16 %v648, %v647
    %v707 = vpack.c.b16 %v650, %v649
    %v708 = vpack.c.b16 %v652, %v651
    %v709 = vpack.c.b16 %v654, %v653
    %v710 = vpack.c.b16 %v656, %v655
    %v711 = vpack.c.b16 %v658, %v657
    %v712 = vpack.c.b16 %v660, %v659
    %v713 = vpack.c.b16 %v662, %v661
    %v714 = vpack.c.b16 %v664, %v663
    %v715 = vpack.c.b16 %v666, %v665
    %vm765 = vcmask 130048
    %v767 = vsel %vm765, %v373, 0
    %v770 = vsel %vm765, %v380, 0
    %v773 = vsel %vm765, %v387, 0
    %v776 = vsel %vm765, %v394, 0
    %v779 = vsel %vm765, %v401, 0
    %v782 = vsel %vm765, %v408, 0
    %v785 = vsel %vm765, %v415, 0
    %v788 = vsel %vm765, %v422, 0
    %790 = vmatprep.subr.bf16.mxu0 0
    %791 = vmatpush1.bf16.msra.mxu0 %v667
    %792 = vmatprep.subr.bf16.mxu0 0
    %793 = vmatpush1.bf16.msra.mxu0 %v668
    %794 = vmatprep.subr.bf16.mxu0 0
    %795 = vmatpush1.bf16.msra.mxu0 %v669
    %796 = vmatprep.subr.bf16.mxu0 0
    %797 = vmatpush1.bf16.msra.mxu0 %v670
    %798 = vmatprep.subr.bf16.mxu0 0
    %799 = vmatpush1.bf16.msra.mxu0 %v671
    %800 = vmatprep.subr.bf16.mxu0 0
    %801 = vmatpush1.bf16.msra.mxu0 %v672
    %802 = vmatprep.subr.bf16.mxu0 0
    %803 = vmatpush1.bf16.msra.mxu0 %v673
    %804 = vmatprep.subr.bf16.mxu0 0
    %805 = vmatpush1.bf16.msra.mxu0 %v674
    %806 = vmatprep.subr.bf16.mxu0 0
    %807 = vmatpush1.bf16.msra.mxu0 %v675
    %808 = vmatprep.subr.bf16.mxu0 0
    %809 = vmatpush1.bf16.msra.mxu0 %v676
    %810 = vmatprep.subr.bf16.mxu0 0
    %811 = vmatpush1.bf16.msra.mxu0 %v677
    %812 = vmatprep.subr.bf16.mxu0 0
    %813 = vmatpush1.bf16.msra.mxu0 %v678
    %814 = vmatprep.subr.bf16.mxu0 0
    %815 = vmatpush1.bf16.msra.mxu0 %v679
    %816 = vmatprep.subr.bf16.mxu0 0
    %817 = vmatpush1.bf16.msra.mxu0 %v680
    %818 = vmatprep.subr.bf16.mxu0 0
    %819 = vmatpush1.bf16.msra.mxu0 %v681
    %820 = vmatprep.subr.bf16.mxu0 0
    %821 = vmatpush1.bf16.msra.mxu0 %v682
    %822 = vmatprep.mubr.bf16.mxu0 %v368
    %823 = vmatmul.mubr.bf16.gmra.mrb[0].mxu0 %v367
    %v824 = vpop.f32.mrb[0].mxu0
    %v825 = vadd.f32 %v190, %v824
    %v826 = vpop.f32.mrb[0].mxu0
    %v827 = vpop.f32.mrb[0].mxu0
    %v828 = vadd.f32 %v190, %v827
    %v829 = vpop.f32.mrb[0].mxu0
    %830 = vmatprep.mubr.bf16.mxu0 %v375
    %831 = vmatmul.mubr.bf16.gmra.mrb[0].mxu0 %v374
    %v832 = vpop.f32.mrb[0].mxu0
    %v833 = vadd.f32 %v190, %v832
    %v834 = vpop.f32.mrb[0].mxu0
    %v835 = vpop.f32.mrb[0].mxu0
    %v836 = vadd.f32 %v190, %v835
    %v837 = vpop.f32.mrb[0].mxu0
    %838 = vmatprep.mubr.bf16.mxu0 %v382
    %839 = vmatmul.mubr.bf16.gmra.mrb[0].mxu0 %v381
    %v840 = vpop.f32.mrb[0].mxu0
    %v841 = vadd.f32 %v190, %v840
    %v842 = vpop.f32.mrb[0].mxu0
    %v843 = vpop.f32.mrb[0].mxu0
    %v844 = vadd.f32 %v190, %v843
    %v845 = vpop.f32.mrb[0].mxu0
    %846 = vmatprep.mubr.bf16.mxu0 %v389
    %847 = vmatmul.mubr.bf16.gmra.mrb[0].mxu0 %v388
    %v848 = vpop.f32.mrb[0].mxu0
    %v849 = vadd.f32 %v190, %v848
    %v850 = vpop.f32.mrb[0].mxu0
    %v851 = vpop.f32.mrb[0].mxu0
    %v852 = vadd.f32 %v190, %v851
    %v853 = vpop.f32.mrb[0].mxu0
    %854 = vmatprep.mubr.bf16.mxu0 %v396
    %855 = vmatmul.mubr.bf16.gmra.mrb[0].mxu0 %v395
    %v856 = vpop.f32.mrb[0].mxu0
    %v857 = vadd.f32 %v190, %v856
    %v858 = vpop.f32.mrb[0].mxu0
    %v859 = vpop.f32.mrb[0].mxu0
    %v860 = vadd.f32 %v190, %v859
    %v861 = vpop.f32.mrb[0].mxu0
    %862 = vmatprep.mubr.bf16.mxu0 %v403
    %863 = vmatmul.mubr.bf16.gmra.mrb[0].mxu0 %v402
    %v864 = vpop.f32.mrb[0].mxu0
    %v865 = vadd.f32 %v190, %v864
    %v866 = vpop.f32.mrb[0].mxu0
    %v867 = vpop.f32.mrb[0].mxu0
    %v868 = vadd.f32 %v190, %v867
    %v869 = vpop.f32.mrb[0].mxu0
    %870 = vmatprep.mubr.bf16.mxu0 %v410
    %871 = vmatmul.mubr.bf16.gmra.mrb[0].mxu0 %v409
    %v872 = vpop.f32.mrb[0].mxu0
    %v873 = vadd.f32 %v190, %v872
    %v874 = vpop.f32.mrb[0].mxu0
    %v875 = vpop.f32.mrb[0].mxu0
    %v876 = vadd.f32 %v190, %v875
    %v877 = vpop.f32.mrb[0].mxu0
    %878 = vmatprep.mubr.bf16.mxu0 %v417
    %879 = vmatmul.mubr.bf16.gmra.mrb[0].mxu0 %v416
    %v880 = vpop.f32.mrb[0].mxu0
    %v881 = vadd.f32 %v190, %v880
    %v882 = vpop.f32.mrb[0].mxu0
    %v883 = vpop.f32.mrb[0].mxu0
    %v884 = vadd.f32 %v190, %v883
    %v885 = vpop.f32.mrb[0].mxu0
    %886 = vdwg.mxu0
    %887 = vmatprep.subr.bf16.mxu0 0
    %888 = vmatpush1.bf16.msra.mxu0 %v683
    %889 = vmatprep.subr.bf16.mxu0 0
    %890 = vmatpush1.bf16.msra.mxu0 %v684
    %891 = vmatprep.subr.bf16.mxu0 0
    %892 = vmatpush1.bf16.msra.mxu0 %v685
    %893 = vmatprep.subr.bf16.mxu0 0
    %894 = vmatpush1.bf16.msra.mxu0 %v686
    %895 = vmatprep.subr.bf16.mxu0 0
    %896 = vmatpush1.bf16.msra.mxu0 %v687
    %897 = vmatprep.subr.bf16.mxu0 0
    %898 = vmatpush1.bf16.msra.mxu0 %v688
    %899 = vmatprep.subr.bf16.mxu0 0
    %900 = vmatpush1.bf16.msra.mxu0 %v689
    %901 = vmatprep.subr.bf16.mxu0 0
    %902 = vmatpush1.bf16.msra.mxu0 %v690
    %903 = vmatprep.subr.bf16.mxu0 0
    %904 = vmatpush1.bf16.msra.mxu0 %v691
    %905 = vmatprep.subr.bf16.mxu0 0
    %906 = vmatpush1.bf16.msra.mxu0 %v692
    %907 = vmatprep.subr.bf16.mxu0 0
    %908 = vmatpush1.bf16.msra.mxu0 %v693
    %909 = vmatprep.subr.bf16.mxu0 0
    %910 = vmatpush1.bf16.msra.mxu0 %v694
    %911 = vmatprep.subr.bf16.mxu0 0
    %912 = vmatpush1.bf16.msra.mxu0 %v695
    %913 = vmatprep.subr.bf16.mxu0 0
    %914 = vmatpush1.bf16.msra.mxu0 %v696
    %915 = vmatprep.subr.bf16.mxu0 0
    %916 = vmatpush1.bf16.msra.mxu0 %v697
    %917 = vmatprep.subr.bf16.mxu0 0
    %918 = vmatpush1.bf16.msra.mxu0 %v698
    %919 = vmatprep.mubr.bf16.mxu0 %v370
    %920 = vmatmul.mubr.bf16.gmra.mrb[0].mxu0 %v369
    %v921 = vpop.f32.mrb[0].mxu0
    %v922 = vadd.f32 %v825, %v921
    %v923 = vpop.f32.mrb[0].mxu0
    %v924 = vpop.f32.mrb[0].mxu0
    %v925 = vadd.f32 %v828, %v924
    %v926 = vpop.f32.mrb[0].mxu0
    %927 = vmatprep.mubr.bf16.mxu0 %v377
    %928 = vmatmul.mubr.bf16.gmra.mrb[0].mxu0 %v376
    %v929 = vpop.f32.mrb[0].mxu0
    %v930 = vadd.f32 %v833, %v929
    %v931 = vpop.f32.mrb[0].mxu0
    %v932 = vpop.f32.mrb[0].mxu0
    %v933 = vadd.f32 %v836, %v932
    %v934 = vpop.f32.mrb[0].mxu0
    %935 = vmatprep.mubr.bf16.mxu0 %v384
    %936 = vmatmul.mubr.bf16.gmra.mrb[0].mxu0 %v383
    %v937 = vpop.f32.mrb[0].mxu0
    %v938 = vadd.f32 %v841, %v937
    %v939 = vpop.f32.mrb[0].mxu0
    %v940 = vpop.f32.mrb[0].mxu0
    %v941 = vadd.f32 %v844, %v940
    %v942 = vpop.f32.mrb[0].mxu0
    %943 = vmatprep.mubr.bf16.mxu0 %v391
    %944 = vmatmul.mubr.bf16.gmra.mrb[0].mxu0 %v390
    %v945 = vpop.f32.mrb[0].mxu0
    %v946 = vadd.f32 %v849, %v945
    %v947 = vpop.f32.mrb[0].mxu0
    %v948 = vpop.f32.mrb[0].mxu0
    %v949 = vadd.f32 %v852, %v948
    %v950 = vpop.f32.mrb[0].mxu0
    %951 = vmatprep.mubr.bf16.mxu0 %v398
    %952 = vmatmul.mubr.bf16.gmra.mrb[0].mxu0 %v397
    %v953 = vpop.f32.mrb[0].mxu0
    %v954 = vadd.f32 %v857, %v953
    %v955 = vpop.f32.mrb[0].mxu0
    %v956 = vpop.f32.mrb[0].mxu0
    %v957 = vadd.f32 %v860, %v956
    %v958 = vpop.f32.mrb[0].mxu0
    %959 = vmatprep.mubr.bf16.mxu0 %v405
    %960 = vmatmul.mubr.bf16.gmra.mrb[0].mxu0 %v404
    %v961 = vpop.f32.mrb[0].mxu0
    %v962 = vadd.f32 %v865, %v961
    %v963 = vpop.f32.mrb[0].mxu0
    %v964 = vpop.f32.mrb[0].mxu0
    %v965 = vadd.f32 %v868, %v964
    %v966 = vpop.f32.mrb[0].mxu0
    %967 = vmatprep.mubr.bf16.mxu0 %v412
    %968 = vmatmul.mubr.bf16.gmra.mrb[0].mxu0 %v411
    %v969 = vpop.f32.mrb[0].mxu0
    %v970 = vadd.f32 %v873, %v969
    %v971 = vpop.f32.mrb[0].mxu0
    %v972 = vpop.f32.mrb[0].mxu0
    %v973 = vadd.f32 %v876, %v972
    %v974 = vpop.f32.mrb[0].mxu0
    %975 = vmatprep.mubr.bf16.mxu0 %v419
    %976 = vmatmul.mubr.bf16.gmra.mrb[0].mxu0 %v418
    %v977 = vpop.f32.mrb[0].mxu0
    %v978 = vadd.f32 %v881, %v977
    %v979 = vpop.f32.mrb[0].mxu0
    %v980 = vpop.f32.mrb[0].mxu0
    %v981 = vadd.f32 %v884, %v980
    %v982 = vpop.f32.mrb[0].mxu0
    %983 = vdwg.mxu0
    %984 = vmatprep.subr.bf16.mxu0 0
    %985 = vmatpush1.bf16.msra.mxu0 %v699
    %986 = vmatprep.subr.bf16.mxu0 0
    %987 = vmatpush1.bf16.msra.mxu0 %v700
    %988 = vmatprep.subr.bf16.mxu0 0
    %989 = vmatpush1.bf16.msra.mxu0 %v701
    %990 = vmatprep.subr.bf16.mxu0 0
    %991 = vmatpush1.bf16.msra.mxu0 %v702
    %992 = vmatprep.subr.bf16.mxu0 0
    %993 = vmatpush1.bf16.msra.mxu0 %v703
    %994 = vmatprep.subr.bf16.mxu0 0
    %995 = vmatpush1.bf16.msra.mxu0 %v704
    %996 = vmatprep.subr.bf16.mxu0 0
    %997 = vmatpush1.bf16.msra.mxu0 %v705
    %998 = vmatprep.subr.bf16.mxu0 0
    %999 = vmatpush1.bf16.msra.mxu0 %v706
    %1000 = vmatprep.subr.bf16.mxu0 0
    %1001 = vmatpush1.bf16.msra.mxu0 %v707
    %1002 = vmatprep.subr.bf16.mxu0 0
    %1003 = vmatpush1.bf16.msra.mxu0 %v708
    %1004 = vmatprep.subr.bf16.mxu0 0
    %1005 = vmatpush1.bf16.msra.mxu0 %v709
    %1006 = vmatprep.subr.bf16.mxu0 0
    %1007 = vmatpush1.bf16.msra.mxu0 %v710
    %1008 = vmatprep.subr.bf16.mxu0 0
    %1009 = vmatpush1.bf16.msra.mxu0 %v711
    %1010 = vmatprep.subr.bf16.mxu0 0
    %1011 = vmatpush1.bf16.msra.mxu0 %v712
    %1012 = vmatprep.subr.bf16.mxu0 0
    %1013 = vmatpush1.bf16.msra.mxu0 %v713
    %1014 = vmatprep.subr.bf16.mxu0 0
    %1015 = vmatpush1.bf16.msra.mxu0 %v714
    %1016 = vmatprep.mubr.bf16.mxu0 %v372
    %1017 = vmatmul.mubr.bf16.gmra.mrb[0].mxu0 %v371
    %v1018 = vpop.f32.mrb[0].mxu0
    %v1019 = vadd.f32 %v922, %v1018
    %v1020 = vpop.f32.mrb[0].mxu0
    %v1021 = vpop.f32.mrb[0].mxu0
    %v1022 = vadd.f32 %v925, %v1021
    %v1023 = vpop.f32.mrb[0].mxu0
    %1024 = vmatprep.mubr.bf16.mxu0 %v379
    %1025 = vmatmul.mubr.bf16.gmra.mrb[0].mxu0 %v378
    %v1026 = vpop.f32.mrb[0].mxu0
    %v1027 = vadd.f32 %v930, %v1026
    %v1028 = vpop.f32.mrb[0].mxu0
    %v1029 = vpop.f32.mrb[0].mxu0
    %v1030 = vadd.f32 %v933, %v1029
    %v1031 = vpop.f32.mrb[0].mxu0
    %1032 = vmatprep.mubr.bf16.mxu0 %v386
    %1033 = vmatmul.mubr.bf16.gmra.mrb[0].mxu0 %v385
    %v1034 = vpop.f32.mrb[0].mxu0
    %v1035 = vadd.f32 %v938, %v1034
    %v1036 = vpop.f32.mrb[0].mxu0
    %v1037 = vpop.f32.mrb[0].mxu0
    %v1038 = vadd.f32 %v941, %v1037
    %v1039 = vpop.f32.mrb[0].mxu0
    %1040 = vmatprep.mubr.bf16.mxu0 %v393
    %1041 = vmatmul.mubr.bf16.gmra.mrb[0].mxu0 %v392
    %v1042 = vpop.f32.mrb[0].mxu0
    %v1043 = vadd.f32 %v946, %v1042
    %v1044 = vpop.f32.mrb[0].mxu0
    %v1045 = vpop.f32.mrb[0].mxu0
    %v1046 = vadd.f32 %v949, %v1045
    %v1047 = vpop.f32.mrb[0].mxu0
    %1048 = vmatprep.mubr.bf16.mxu0 %v400
    %1049 = vmatmul.mubr.bf16.gmra.mrb[0].mxu0 %v399
    %v1050 = vpop.f32.mrb[0].mxu0
    %v1051 = vadd.f32 %v954, %v1050
    %v1052 = vpop.f32.mrb[0].mxu0
    %v1053 = vpop.f32.mrb[0].mxu0
    %v1054 = vadd.f32 %v957, %v1053
    %v1055 = vpop.f32.mrb[0].mxu0
    %1056 = vmatprep.mubr.bf16.mxu0 %v407
    %1057 = vmatmul.mubr.bf16.gmra.mrb[0].mxu0 %v406
    %v1058 = vpop.f32.mrb[0].mxu0
    %v1059 = vadd.f32 %v962, %v1058
    %v1060 = vpop.f32.mrb[0].mxu0
    %v1061 = vpop.f32.mrb[0].mxu0
    %v1062 = vadd.f32 %v965, %v1061
    %v1063 = vpop.f32.mrb[0].mxu0
    %1064 = vmatprep.mubr.bf16.mxu0 %v414
    %1065 = vmatmul.mubr.bf16.gmra.mrb[0].mxu0 %v413
    %v1066 = vpop.f32.mrb[0].mxu0
    %v1067 = vadd.f32 %v970, %v1066
    %v1068 = vpop.f32.mrb[0].mxu0
    %v1069 = vpop.f32.mrb[0].mxu0
    %v1070 = vadd.f32 %v973, %v1069
    %v1071 = vpop.f32.mrb[0].mxu0
    %1072 = vmatprep.mubr.bf16.mxu0 %v421
    %1073 = vmatmul.mubr.bf16.gmra.mrb[0].mxu0 %v420
    %v1074 = vpop.f32.mrb[0].mxu0
    %v1075 = vadd.f32 %v978, %v1074
    %v1076 = vpop.f32.mrb[0].mxu0
    %v1077 = vpop.f32.mrb[0].mxu0
    %v1078 = vadd.f32 %v981, %v1077
    %v1079 = vpop.f32.mrb[0].mxu0
    %1080 = vdwg.mxu0
    %1081 = vmatprep.subr.bf16.mxu0 0
    %1082 = vmatpush1.bf16.msra.mxu0 %v715
    %1083 = vmatprep.subr.bf16.mxu0 0
    %1084 = vmatpush1.bf16.msra.mxu0 0
    %1085 = vmatprep.subr.bf16.mxu0 0
    %1086 = vmatpush1.bf16.msra.mxu0 0
    %1087 = vmatprep.subr.bf16.mxu0 0
    %1088 = vmatpush1.bf16.msra.mxu0 0
    %1089 = vmatprep.subr.bf16.mxu0 0
    %1090 = vmatpush1.bf16.msra.mxu0 0
    %1091 = vmatprep.subr.bf16.mxu0 0
    %1092 = vmatpush1.bf16.msra.mxu0 0
    %1093 = vmatprep.subr.bf16.mxu0 0
    %1094 = vmatpush1.bf16.msra.mxu0 0
    %1095 = vmatprep.subr.bf16.mxu0 0
    %1096 = vmatpush1.bf16.msra.mxu0 0
    %1097 = vmatprep.subr.bf16.mxu0 0
    %1098 = vmatpush1.bf16.msra.mxu0 0
    %1099 = vmatprep.subr.bf16.mxu0 0
    %1100 = vmatpush1.bf16.msra.mxu0 0
    %1101 = vmatprep.subr.bf16.mxu0 0
    %1102 = vmatpush1.bf16.msra.mxu0 0
    %1103 = vmatprep.subr.bf16.mxu0 0
    %1104 = vmatpush1.bf16.msra.mxu0 0
    %1105 = vmatprep.subr.bf16.mxu0 0
    %1106 = vmatpush1.bf16.msra.mxu0 0
    %1107 = vmatprep.subr.bf16.mxu0 0
    %1108 = vmatpush1.bf16.msra.mxu0 0
    %1109 = vmatprep.subr.bf16.mxu0 0
    %1110 = vmatpush1.bf16.msra.mxu0 0
    %1111 = vmatprep.subr.bf16.mxu0 0
    %1112 = vmatpush1.bf16.msra.mxu0 0
    %1113 = vmatprep.mubr.bf16.mxu0 0
    %1114 = vmatmul.mubr.bf16.gmra.mrb[0].mxu0 %v767
    %v1115 = vpop.f32.mrb[0].mxu0
    %v1116 = vadd.f32 %v1019, %v1115
    %v1117 = vpop.f32.mrb[0].mxu0
    %v1118 = vpop.f32.mrb[0].mxu0
    %v1119 = vadd.f32 %v1022, %v1118
    %v1120 = vpop.f32.mrb[0].mxu0
    %1121 = vmatprep.mubr.bf16.mxu0 0
    %1122 = vmatmul.mubr.bf16.gmra.mrb[0].mxu0 %v770
    %v1123 = vpop.f32.mrb[0].mxu0
    %v1124 = vadd.f32 %v1027, %v1123
    %v1125 = vpop.f32.mrb[0].mxu0
    %v1126 = vpop.f32.mrb[0].mxu0
    %v1127 = vadd.f32 %v1030, %v1126
    %v1128 = vpop.f32.mrb[0].mxu0
    %1129 = vmatprep.mubr.bf16.mxu0 0
    %1130 = vmatmul.mubr.bf16.gmra.mrb[0].mxu0 %v773
    %v1131 = vpop.f32.mrb[0].mxu0
    %v1132 = vadd.f32 %v1035, %v1131
    %v1133 = vpop.f32.mrb[0].mxu0
    %v1134 = vpop.f32.mrb[0].mxu0
    %v1135 = vadd.f32 %v1038, %v1134
    %v1136 = vpop.f32.mrb[0].mxu0
    %1137 = vmatprep.mubr.bf16.mxu0 0
    %1138 = vmatmul.mubr.bf16.gmra.mrb[0].mxu0 %v776
    %v1139 = vpop.f32.mrb[0].mxu0
    %v1140 = vadd.f32 %v1043, %v1139
    %v1141 = vpop.f32.mrb[0].mxu0
    %v1142 = vpop.f32.mrb[0].mxu0
    %v1143 = vadd.f32 %v1046, %v1142
    %v1144 = vpop.f32.mrb[0].mxu0
    %1145 = vmatprep.mubr.bf16.mxu0 0
    %1146 = vmatmul.mubr.bf16.gmra.mrb[0].mxu0 %v779
    %v1147 = vpop.f32.mrb[0].mxu0
    %v1148 = vadd.f32 %v1051, %v1147
    %v1149 = vpop.f32.mrb[0].mxu0
    %v1150 = vpop.f32.mrb[0].mxu0
    %v1151 = vadd.f32 %v1054, %v1150
    %v1152 = vpop.f32.mrb[0].mxu0
    %1153 = vmatprep.mubr.bf16.mxu0 0
    %1154 = vmatmul.mubr.bf16.gmra.mrb[0].mxu0 %v782
    %v1155 = vpop.f32.mrb[0].mxu0
    %v1156 = vadd.f32 %v1059, %v1155
    %v1157 = vpop.f32.mrb[0].mxu0
    %v1158 = vpop.f32.mrb[0].mxu0
    %v1159 = vadd.f32 %v1062, %v1158
    %v1160 = vpop.f32.mrb[0].mxu0
    %1161 = vmatprep.mubr.bf16.mxu0 0
    %1162 = vmatmul.mubr.bf16.gmra.mrb[0].mxu0 %v785
    %v1163 = vpop.f32.mrb[0].mxu0
    %v1164 = vadd.f32 %v1067, %v1163
    %v1165 = vpop.f32.mrb[0].mxu0
    %v1166 = vpop.f32.mrb[0].mxu0
    %v1167 = vadd.f32 %v1070, %v1166
    %v1168 = vpop.f32.mrb[0].mxu0
    %1169 = vmatprep.mubr.bf16.mxu0 0
    %1170 = vmatmul.mubr.bf16.gmra.mrb[0].mxu0 %v788
    %v1171 = vpop.f32.mrb[0].mxu0
    %v1172 = vadd.f32 %v1075, %v1171
    %v1173 = vpop.f32.mrb[0].mxu0
    %v1174 = vpop.f32.mrb[0].mxu0
    %v1175 = vadd.f32 %v1078, %v1174
    %v1176 = vpop.f32.mrb[0].mxu0
    %1177 = vdwg.mxu0
    %v1178 = vxor.u32 %v1116, 2147483648
    %v1179 = vxor.u32 %v1119, 2147483648
    %v1180 = vxor.u32 %v1124, 2147483648
    %v1181 = vxor.u32 %v1127, 2147483648
    %v1182 = vxor.u32 %v1132, 2147483648
    %v1183 = vxor.u32 %v1135, 2147483648
    %v1184 = vxor.u32 %v1140, 2147483648
    %v1185 = vxor.u32 %v1143, 2147483648
    %v1186 = vxor.u32 %v1148, 2147483648
    %v1187 = vxor.u32 %v1151, 2147483648
    %v1188 = vxor.u32 %v1156, 2147483648
    %v1189 = vxor.u32 %v1159, 2147483648
    %v1190 = vxor.u32 %v1164, 2147483648
    %v1191 = vxor.u32 %v1167, 2147483648
    %v1192 = vxor.u32 %v1172, 2147483648
    %v1193 = vxor.u32 %v1175, 2147483648
    %v1194 = vmul.f32 %v1178, 1.442695
    %v1195 = vpow.pop %v1194
    %v1196 = vmul.f32 %v1179, 1.442695
    %v1197 = vpow.pop %v1196
    %v1198 = vmul.f32 %v1180, 1.442695
    %v1199 = vpow.pop %v1198
    %v1200 = vmul.f32 %v1181, 1.442695
    %v1201 = vpow.pop %v1200
    %v1202 = vmul.f32 %v1182, 1.442695
    %v1203 = vpow.pop %v1202
    %v1204 = vmul.f32 %v1183, 1.442695
    %v1205 = vpow.pop %v1204
    %v1206 = vmul.f32 %v1184, 1.442695
    %v1207 = vpow.pop %v1206
    %v1208 = vmul.f32 %v1185, 1.442695
    %v1209 = vpow.pop %v1208
    %v1210 = vmul.f32 %v1186, 1.442695
    %v1211 = vpow.pop %v1210
    %v1212 = vmul.f32 %v1187, 1.442695
    %v1213 = vpow.pop %v1212
    %v1214 = vmul.f32 %v1188, 1.442695
    %v1215 = vpow.pop %v1214
    %v1216 = vmul.f32 %v1189, 1.442695
    %v1217 = vpow.pop %v1216
    %v1218 = vmul.f32 %v1190, 1.442695
    %v1219 = vpow.pop %v1218
    %v1220 = vmul.f32 %v1191, 1.442695
    %v1221 = vpow.pop %v1220
    %v1222 = vmul.f32 %v1192, 1.442695
    %v1223 = vpow.pop %v1222
    %v1224 = vmul.f32 %v1193, 1.442695
    %v1225 = vpow.pop %v1224
    %v1226 = vadd.f32 %v1195, 1.0
    %v1227 = vadd.f32 %v1197, 1.0
    %v1228 = vadd.f32 %v1199, 1.0
    %v1229 = vadd.f32 %v1201, 1.0
    %v1230 = vadd.f32 %v1203, 1.0
    %v1231 = vadd.f32 %v1205, 1.0
    %v1232 = vadd.f32 %v1207, 1.0
    %v1233 = vadd.f32 %v1209, 1.0
    %v1234 = vadd.f32 %v1211, 1.0
    %v1235 = vadd.f32 %v1213, 1.0
    %v1236 = vadd.f32 %v1215, 1.0
    %v1237 = vadd.f32 %v1217, 1.0
    %v1238 = vadd.f32 %v1219, 1.0
    %v1239 = vadd.f32 %v1221, 1.0
    %v1240 = vadd.f32 %v1223, 1.0
    %v1241 = vadd.f32 %v1225, 1.0
    %v1242 = vrcp.pop %v1226
    %v1243 = vmul.f32 1.0, %v1242
    %v1244 = vrcp.pop %v1227
    %v1245 = vmul.f32 1.0, %v1244
    %v1246 = vrcp.pop %v1228
    %v1247 = vmul.f32 1.0, %v1246
    %v1248 = vrcp.pop %v1229
    %v1249 = vmul.f32 1.0, %v1248
    %v1250 = vrcp.pop %v1230
    %v1251 = vmul.f32 1.0, %v1250
    %v1252 = vrcp.pop %v1231
    %v1253 = vmul.f32 1.0, %v1252
    %v1254 = vrcp.pop %v1232
    %v1255 = vmul.f32 1.0, %v1254
    %v1256 = vrcp.pop %v1233
    %v1257 = vmul.f32 1.0, %v1256
    %v1258 = vrcp.pop %v1234
    %v1259 = vmul.f32 1.0, %v1258
    %v1260 = vrcp.pop %v1235
    %v1261 = vmul.f32 1.0, %v1260
    %v1262 = vrcp.pop %v1236
    %v1263 = vmul.f32 1.0, %v1262
    %v1264 = vrcp.pop %v1237
    %v1265 = vmul.f32 1.0, %v1264
    %v1266 = vrcp.pop %v1238
    %v1267 = vmul.f32 1.0, %v1266
    %v1268 = vrcp.pop %v1239
    %v1269 = vmul.f32 1.0, %v1268
    %v1270 = vrcp.pop %v1240
    %v1271 = vmul.f32 1.0, %v1270
    %v1272 = vrcp.pop %v1241
    %v1273 = vmul.f32 1.0, %v1272
    %v1274 = vld [vmem:[%s2] sm:$0xff]
    %v1275 = vld [vmem:[%s2 + $0x8] sm:$0xff]
    %v1276 = vld [vmem:[%s2 + $0x10] sm:$0xff]
    %v1277 = vld [vmem:[%s2 + $0x18] sm:$0xff]
    %v1278 = vld [vmem:[%s2 + $0x20] sm:$0xff]
    %v1279 = vld [vmem:[%s2 + $0x28] sm:$0xff]
    %v1280 = vld [vmem:[%s2 + $0x30] sm:$0xff]
    %v1281 = vld [vmem:[%s2 + $0x38] sm:$0xff]
    %v1282 = vld [vmem:[%s2 + $0x40] sm:$0xff]
    %v1283 = vld [vmem:[%s2 + $0x48] sm:$0xff]
    %v1284 = vld [vmem:[%s2 + $0x50] sm:$0xff]
    %v1285 = vld [vmem:[%s2 + $0x58] sm:$0xff]
    %v1286 = vld [vmem:[%s2 + $0x60] sm:$0xff]
    %v1287 = vld [vmem:[%s2 + $0x68] sm:$0xff]
    %v1288 = vld [vmem:[%s2 + $0x70] sm:$0xff]
    %v1289 = vld [vmem:[%s2 + $0x78] sm:$0xff]
    %v1290 = vlaneseq
    %v1291 = vshrl.u32 %v1290, 7
    %v1292 = vsub.s32 0, %v1291
    %v1293 = vrot.slane %v87, %v1292
    %1294 = vmatprep.subr.mxu0 0.0
    %1295 = vmatpush1.msra.mxu0 %v1274
    %1296 = vmatprep.subr.mxu0 0.0
    %1297 = vmatpush1.msra.mxu0 %v1275
    %1298 = vmatprep.subr.mxu0 0.0
    %1299 = vmatpush1.msra.mxu0 %v1276
    %1300 = vmatprep.subr.mxu0 0.0
    %1301 = vmatpush1.msra.mxu0 %v1277
    %1302 = vmatprep.subr.mxu0 0.0
    %1303 = vmatpush1.msra.mxu0 %v1278
    %1304 = vmatprep.subr.mxu0 0.0
    %1305 = vmatpush1.msra.mxu0 %v1279
    %1306 = vmatprep.subr.mxu0 0.0
    %1307 = vmatpush1.msra.mxu0 %v1280
    %1308 = vmatprep.subr.mxu0 0.0
    %1309 = vmatpush1.msra.mxu0 %v1281
    %1310 = vmatprep.subr.mxu0 0.0
    %1311 = vmatpush1.msra.mxu0 %v1282
    %1312 = vmatprep.subr.mxu0 0.0
    %1313 = vmatpush1.msra.mxu0 %v1283
    %1314 = vmatprep.subr.mxu0 0.0
    %1315 = vmatpush1.msra.mxu0 %v1284
    %1316 = vmatprep.subr.mxu0 0.0
    %1317 = vmatpush1.msra.mxu0 %v1285
    %1318 = vmatprep.subr.mxu0 0.0
    %1319 = vmatpush1.msra.mxu0 %v1286
    %1320 = vmatprep.subr.mxu0 0.0
    %1321 = vmatpush1.msra.mxu0 %v1287
    %1322 = vmatprep.subr.mxu0 0.0
    %1323 = vmatpush1.msra.mxu0 %v1288
    %1324 = vmatprep.subr.mxu0 0.0
    %1325 = vmatpush1.msra.mxu0 %v1289
    %1326 = vmatprep.subr.mxu0 0.0
    %1327 = vmatpush1.msra.mxu0 0.0
    %1328 = vmatprep.subr.mxu0 0.0
    %1329 = vmatpush1.msra.mxu0 0.0
    %1330 = vmatprep.subr.mxu0 0.0
    %1331 = vmatpush1.msra.mxu0 0.0
    %1332 = vmatprep.subr.mxu0 0.0
    %1333 = vmatpush1.msra.mxu0 0.0
    %1334 = vmatprep.subr.mxu0 0.0
    %1335 = vmatpush1.msra.mxu0 0.0
    %1336 = vmatprep.subr.mxu0 0.0
    %1337 = vmatpush1.msra.mxu0 0.0
    %1338 = vmatprep.subr.mxu0 0.0
    %1339 = vmatpush1.msra.mxu0 0.0
    %1340 = vmatprep.subr.mxu0 0.0
    %1341 = vmatpush1.msra.mxu0 0.0
    %1342 = vmatprep.subr.mxu0 0.0
    %1343 = vmatpush1.msra.mxu0 0.0
    %1344 = vmatprep.subr.mxu0 0.0
    %1345 = vmatpush1.msra.mxu0 0.0
    %1346 = vmatprep.subr.mxu0 0.0
    %1347 = vmatpush1.msra.mxu0 0.0
    %1348 = vmatprep.subr.mxu0 0.0
    %1349 = vmatpush1.msra.mxu0 0.0
    %1350 = vmatprep.subr.mxu0 0.0
    %1351 = vmatpush1.msra.mxu0 0.0
    %1352 = vmatprep.subr.mxu0 0.0
    %1353 = vmatpush1.msra.mxu0 0.0
    %1354 = vmatprep.subr.mxu0 0.0
    %1355 = vmatpush1.msra.mxu0 0.0
    %1356 = vmatprep.subr.mxu0 0.0
    %1357 = vmatpush1.msra.mxu0 0.0
    %1358 = vmatprep.mubr.f32.mxu0 0.0
    %1359 = vmatmul.mubr.f32.gmra.mrb[0].mxu0 %v1243
    %v1360 = vpop.f32.mrb[0].mxu0
    %v1361 = vadd.f32 %v1293, %v1360
    %v1362 = vpop.f32.mrb[0].mxu0
    %1363 = vmatprep.mubr.f32.mxu0 0.0
    %1364 = vmatmul.mubr.f32.gmra.mrb[0].mxu0 %v1245
    %v1365 = vpop.f32.mrb[0].mxu0
    %v1366 = vadd.f32 %v1293, %v1365
    %v1367 = vpop.f32.mrb[0].mxu0
    %1368 = vmatprep.mubr.f32.mxu0 0.0
    %1369 = vmatmul.mubr.f32.gmra.mrb[0].mxu0 %v1247
    %v1370 = vpop.f32.mrb[0].mxu0
    %v1371 = vadd.f32 %v1293, %v1370
    %v1372 = vpop.f32.mrb[0].mxu0
    %1373 = vmatprep.mubr.f32.mxu0 0.0
    %1374 = vmatmul.mubr.f32.gmra.mrb[0].mxu0 %v1249
    %v1375 = vpop.f32.mrb[0].mxu0
    %v1376 = vadd.f32 %v1293, %v1375
    %v1377 = vpop.f32.mrb[0].mxu0
    %1378 = vmatprep.mubr.f32.mxu0 0.0
    %1379 = vmatmul.mubr.f32.gmra.mrb[0].mxu0 %v1251
    %v1380 = vpop.f32.mrb[0].mxu0
    %v1381 = vadd.f32 %v1293, %v1380
    %v1382 = vpop.f32.mrb[0].mxu0
    %1383 = vmatprep.mubr.f32.mxu0 0.0
    %1384 = vmatmul.mubr.f32.gmra.mrb[0].mxu0 %v1253
    %v1385 = vpop.f32.mrb[0].mxu0
    %v1386 = vadd.f32 %v1293, %v1385
    %v1387 = vpop.f32.mrb[0].mxu0
    %1388 = vmatprep.mubr.f32.mxu0 0.0
    %1389 = vmatmul.mubr.f32.gmra.mrb[0].mxu0 %v1255
    %v1390 = vpop.f32.mrb[0].mxu0
    %v1391 = vadd.f32 %v1293, %v1390
    %v1392 = vpop.f32.mrb[0].mxu0
    %1393 = vmatprep.mubr.f32.mxu0 0.0
    %1394 = vmatmul.mubr.f32.gmra.mrb[0].mxu0 %v1257
    %v1395 = vpop.f32.mrb[0].mxu0
    %v1396 = vadd.f32 %v1293, %v1395
    %v1397 = vpop.f32.mrb[0].mxu0
    %1398 = vmatprep.mubr.f32.mxu0 0.0
    %1399 = vmatmul.mubr.f32.gmra.mrb[0].mxu0 %v1259
    %v1400 = vpop.f32.mrb[0].mxu0
    %v1401 = vadd.f32 %v1293, %v1400
    %v1402 = vpop.f32.mrb[0].mxu0
    %1403 = vmatprep.mubr.f32.mxu0 0.0
    %1404 = vmatmul.mubr.f32.gmra.mrb[0].mxu0 %v1261
    %v1405 = vpop.f32.mrb[0].mxu0
    %v1406 = vadd.f32 %v1293, %v1405
    %v1407 = vpop.f32.mrb[0].mxu0
    %1408 = vmatprep.mubr.f32.mxu0 0.0
    %1409 = vmatmul.mubr.f32.gmra.mrb[0].mxu0 %v1263
    %v1410 = vpop.f32.mrb[0].mxu0
    %v1411 = vadd.f32 %v1293, %v1410
    %v1412 = vpop.f32.mrb[0].mxu0
    %1413 = vmatprep.mubr.f32.mxu0 0.0
    %1414 = vmatmul.mubr.f32.gmra.mrb[0].mxu0 %v1265
    %v1415 = vpop.f32.mrb[0].mxu0
    %v1416 = vadd.f32 %v1293, %v1415
    %v1417 = vpop.f32.mrb[0].mxu0
    %1418 = vmatprep.mubr.f32.mxu0 0.0
    %1419 = vmatmul.mubr.f32.gmra.mrb[0].mxu0 %v1267
    %v1420 = vpop.f32.mrb[0].mxu0
    %v1421 = vadd.f32 %v1293, %v1420
    %v1422 = vpop.f32.mrb[0].mxu0
    %1423 = vmatprep.mubr.f32.mxu0 0.0
    %1424 = vmatmul.mubr.f32.gmra.mrb[0].mxu0 %v1269
    %v1425 = vpop.f32.mrb[0].mxu0
    %v1426 = vadd.f32 %v1293, %v1425
    %v1427 = vpop.f32.mrb[0].mxu0
    %1428 = vmatprep.mubr.f32.mxu0 0.0
    %1429 = vmatmul.mubr.f32.gmra.mrb[0].mxu0 %v1271
    %v1430 = vpop.f32.mrb[0].mxu0
    %v1431 = vadd.f32 %v1293, %v1430
    %v1432 = vpop.f32.mrb[0].mxu0
    %1433 = vmatprep.mubr.f32.mxu0 0.0
    %1434 = vmatmul.mubr.f32.gmra.mrb[0].mxu0 %v1273
    %v1435 = vpop.f32.mrb[0].mxu0
    %v1436 = vadd.f32 %v1293, %v1435
    %v1437 = vpop.f32.mrb[0].mxu0
    %1438 = vdwg.mxu0
    %v1439 = vmax.f32 %v1361, 0.0
    %v1440 = vmax.f32 %v1366, 0.0
    %v1441 = vmax.f32 %v1371, 0.0
    %v1442 = vmax.f32 %v1376, 0.0
    %v1443 = vmax.f32 %v1381, 0.0
    %v1444 = vmax.f32 %v1386, 0.0
    %v1445 = vmax.f32 %v1391, 0.0
    %v1446 = vmax.f32 %v1396, 0.0
    %v1447 = vmax.f32 %v1401, 0.0
    %v1448 = vmax.f32 %v1406, 0.0
    %v1449 = vmax.f32 %v1411, 0.0
    %v1450 = vmax.f32 %v1416, 0.0
    %v1451 = vmax.f32 %v1421, 0.0
    %v1452 = vmax.f32 %v1426, 0.0
    %v1453 = vmax.f32 %v1431, 0.0
    %v1454 = vmax.f32 %v1436, 0.0
    %v1455 = vld [vmem:[%s3] sm:$0xff]
    %v1456 = vld [vmem:[%s3 + $0x8] sm:$0xff]
    %v1457 = vld [vmem:[%s3 + $0x10] sm:$0xff]
    %v1458 = vld [vmem:[%s3 + $0x18] sm:$0xff]
    %v1459 = vld [vmem:[%s3 + $0x20] sm:$0xff]
    %v1460 = vld [vmem:[%s3 + $0x28] sm:$0xff]
    %v1461 = vld [vmem:[%s3 + $0x30] sm:$0xff]
    %v1462 = vld [vmem:[%s3 + $0x38] sm:$0xff]
    %v1463 = vld [vmem:[%s3 + $0x40] sm:$0xff]
    %v1464 = vld [vmem:[%s3 + $0x48] sm:$0xff]
    %v1465 = vld [vmem:[%s3 + $0x50] sm:$0xff]
    %v1466 = vld [vmem:[%s3 + $0x58] sm:$0xff]
    %v1467 = vld [vmem:[%s3 + $0x60] sm:$0xff]
    %v1468 = vld [vmem:[%s3 + $0x68] sm:$0xff]
    %v1469 = vld [vmem:[%s3 + $0x70] sm:$0xff]
    %v1470 = vld [vmem:[%s3 + $0x78] sm:$0xff]
    %v1471 = vlaneseq
    %v1472 = vshrl.u32 %v1471, 7
    %v1473 = vsub.s32 0, %v1472
    %v1474 = vrot.slane %v88, %v1473
    %1475 = vmatprep.subr.mxu0 0.0
    %1476 = vmatpush1.msra.mxu0 %v1455
    %1477 = vmatprep.subr.mxu0 0.0
    %1478 = vmatpush1.msra.mxu0 %v1456
    %1479 = vmatprep.subr.mxu0 0.0
    %1480 = vmatpush1.msra.mxu0 %v1457
    %1481 = vmatprep.subr.mxu0 0.0
    %1482 = vmatpush1.msra.mxu0 %v1458
    %1483 = vmatprep.subr.mxu0 0.0
    %1484 = vmatpush1.msra.mxu0 %v1459
    %1485 = vmatprep.subr.mxu0 0.0
    %1486 = vmatpush1.msra.mxu0 %v1460
    %1487 = vmatprep.subr.mxu0 0.0
    %1488 = vmatpush1.msra.mxu0 %v1461
    %1489 = vmatprep.subr.mxu0 0.0
    %1490 = vmatpush1.msra.mxu0 %v1462
    %1491 = vmatprep.subr.mxu0 0.0
    %1492 = vmatpush1.msra.mxu0 %v1463
    %1493 = vmatprep.subr.mxu0 0.0
    %1494 = vmatpush1.msra.mxu0 %v1464
    %1495 = vmatprep.subr.mxu0 0.0
    %1496 = vmatpush1.msra.mxu0 %v1465
    %1497 = vmatprep.subr.mxu0 0.0
    %1498 = vmatpush1.msra.mxu0 %v1466
    %1499 = vmatprep.subr.mxu0 0.0
    %1500 = vmatpush1.msra.mxu0 %v1467
    %1501 = vmatprep.subr.mxu0 0.0
    %1502 = vmatpush1.msra.mxu0 %v1468
    %1503 = vmatprep.subr.mxu0 0.0
    %1504 = vmatpush1.msra.mxu0 %v1469
    %1505 = vmatprep.subr.mxu0 0.0
    %1506 = vmatpush1.msra.mxu0 %v1470
    %1507 = vmatprep.subr.mxu0 0.0
    %1508 = vmatpush1.msra.mxu0 0.0
    %1509 = vmatprep.subr.mxu0 0.0
    %1510 = vmatpush1.msra.mxu0 0.0
    %1511 = vmatprep.subr.mxu0 0.0
    %1512 = vmatpush1.msra.mxu0 0.0
    %1513 = vmatprep.subr.mxu0 0.0
    %1514 = vmatpush1.msra.mxu0 0.0
    %1515 = vmatprep.subr.mxu0 0.0
    %1516 = vmatpush1.msra.mxu0 0.0
    %1517 = vmatprep.subr.mxu0 0.0
    %1518 = vmatpush1.msra.mxu0 0.0
    %1519 = vmatprep.subr.mxu0 0.0
    %1520 = vmatpush1.msra.mxu0 0.0
    %1521 = vmatprep.subr.mxu0 0.0
    %1522 = vmatpush1.msra.mxu0 0.0
    %1523 = vmatprep.subr.mxu0 0.0
    %1524 = vmatpush1.msra.mxu0 0.0
    %1525 = vmatprep.subr.mxu0 0.0
    %1526 = vmatpush1.msra.mxu0 0.0
    %1527 = vmatprep.subr.mxu0 0.0
    %1528 = vmatpush1.msra.mxu0 0.0
    %1529 = vmatprep.subr.mxu0 0.0
    %1530 = vmatpush1.msra.mxu0 0.0
    %1531 = vmatprep.subr.mxu0 0.0
    %1532 = vmatpush1.msra.mxu0 0.0
    %1533 = vmatprep.subr.mxu0 0.0
    %1534 = vmatpush1.msra.mxu0 0.0
    %1535 = vmatprep.subr.mxu0 0.0
    %1536 = vmatpush1.msra.mxu0 0.0
    %1537 = vmatprep.subr.mxu0 0.0
    %1538 = vmatpush1.msra.mxu0 0.0
    %1539 = vmatprep.mubr.f32.mxu0 0.0
    %1540 = vmatmul.mubr.f32.gmra.mrb[0].mxu0 %v1439
    %v1541 = vpop.f32.mrb[0].mxu0
    %v1542 = vadd.f32 %v1474, %v1541
    %v1543 = vpop.f32.mrb[0].mxu0
    %1544 = vmatprep.mubr.f32.mxu0 0.0
    %1545 = vmatmul.mubr.f32.gmra.mrb[0].mxu0 %v1440
    %v1546 = vpop.f32.mrb[0].mxu0
    %v1547 = vadd.f32 %v1474, %v1546
    %v1548 = vpop.f32.mrb[0].mxu0
    %1549 = vmatprep.mubr.f32.mxu0 0.0
    %1550 = vmatmul.mubr.f32.gmra.mrb[0].mxu0 %v1441
    %v1551 = vpop.f32.mrb[0].mxu0
    %v1552 = vadd.f32 %v1474, %v1551
    %v1553 = vpop.f32.mrb[0].mxu0
    %1554 = vmatprep.mubr.f32.mxu0 0.0
    %1555 = vmatmul.mubr.f32.gmra.mrb[0].mxu0 %v1442
    %v1556 = vpop.f32.mrb[0].mxu0
    %v1557 = vadd.f32 %v1474, %v1556
    %v1558 = vpop.f32.mrb[0].mxu0
    %1559 = vmatprep.mubr.f32.mxu0 0.0
    %1560 = vmatmul.mubr.f32.gmra.mrb[0].mxu0 %v1443
    %v1561 = vpop.f32.mrb[0].mxu0
    %v1562 = vadd.f32 %v1474, %v1561
    %v1563 = vpop.f32.mrb[0].mxu0
    %1564 = vmatprep.mubr.f32.mxu0 0.0
    %1565 = vmatmul.mubr.f32.gmra.mrb[0].mxu0 %v1444
    %v1566 = vpop.f32.mrb[0].mxu0
    %v1567 = vadd.f32 %v1474, %v1566
    %v1568 = vpop.f32.mrb[0].mxu0
    %1569 = vmatprep.mubr.f32.mxu0 0.0
    %1570 = vmatmul.mubr.f32.gmra.mrb[0].mxu0 %v1445
    %v1571 = vpop.f32.mrb[0].mxu0
    %v1572 = vadd.f32 %v1474, %v1571
    %v1573 = vpop.f32.mrb[0].mxu0
    %1574 = vmatprep.mubr.f32.mxu0 0.0
    %1575 = vmatmul.mubr.f32.gmra.mrb[0].mxu0 %v1446
    %v1576 = vpop.f32.mrb[0].mxu0
    %v1577 = vadd.f32 %v1474, %v1576
    %v1578 = vpop.f32.mrb[0].mxu0
    %1579 = vmatprep.mubr.f32.mxu0 0.0
    %1580 = vmatmul.mubr.f32.gmra.mrb[0].mxu0 %v1447
    %v1581 = vpop.f32.mrb[0].mxu0
    %v1582 = vadd.f32 %v1474, %v1581
    %v1583 = vpop.f32.mrb[0].mxu0
    %1584 = vmatprep.mubr.f32.mxu0 0.0
    %1585 = vmatmul.mubr.f32.gmra.mrb[0].mxu0 %v1448
    %v1586 = vpop.f32.mrb[0].mxu0
    %v1587 = vadd.f32 %v1474, %v1586
    %v1588 = vpop.f32.mrb[0].mxu0
    %1589 = vmatprep.mubr.f32.mxu0 0.0
    %1590 = vmatmul.mubr.f32.gmra.mrb[0].mxu0 %v1449
    %v1591 = vpop.f32.mrb[0].mxu0
    %v1592 = vadd.f32 %v1474, %v1591
    %v1593 = vpop.f32.mrb[0].mxu0
    %1594 = vmatprep.mubr.f32.mxu0 0.0
    %1595 = vmatmul.mubr.f32.gmra.mrb[0].mxu0 %v1450
    %v1596 = vpop.f32.mrb[0].mxu0
    %v1597 = vadd.f32 %v1474, %v1596
    %v1598 = vpop.f32.mrb[0].mxu0
    %1599 = vmatprep.mubr.f32.mxu0 0.0
    %1600 = vmatmul.mubr.f32.gmra.mrb[0].mxu0 %v1451
    %v1601 = vpop.f32.mrb[0].mxu0
    %v1602 = vadd.f32 %v1474, %v1601
    %v1603 = vpop.f32.mrb[0].mxu0
    %1604 = vmatprep.mubr.f32.mxu0 0.0
    %1605 = vmatmul.mubr.f32.gmra.mrb[0].mxu0 %v1452
    %v1606 = vpop.f32.mrb[0].mxu0
    %v1607 = vadd.f32 %v1474, %v1606
    %v1608 = vpop.f32.mrb[0].mxu0
    %1609 = vmatprep.mubr.f32.mxu0 0.0
    %1610 = vmatmul.mubr.f32.gmra.mrb[0].mxu0 %v1453
    %v1611 = vpop.f32.mrb[0].mxu0
    %v1612 = vadd.f32 %v1474, %v1611
    %v1613 = vpop.f32.mrb[0].mxu0
    %1614 = vmatprep.mubr.f32.mxu0 0.0
    %1615 = vmatmul.mubr.f32.gmra.mrb[0].mxu0 %v1454
    %v1616 = vpop.f32.mrb[0].mxu0
    %v1617 = vadd.f32 %v1474, %v1616
    %v1618 = vpop.f32.mrb[0].mxu0
    %1619 = vdwg.mxu0
    %1620 = vst [vmem:[#allocation2] sm:$0xff] %v1542
    %1621 = vst [vmem:[#allocation2 + $0x8] sm:$0xff] %v1547
    %1622 = vst [vmem:[#allocation2 + $0x10] sm:$0xff] %v1552
    %1623 = vst [vmem:[#allocation2 + $0x18] sm:$0xff] %v1557
    %1624 = vst [vmem:[#allocation2 + $0x20] sm:$0xff] %v1562
    %1625 = vst [vmem:[#allocation2 + $0x28] sm:$0xff] %v1567
    %1626 = vst [vmem:[#allocation2 + $0x30] sm:$0xff] %v1572
    %1627 = vst [vmem:[#allocation2 + $0x38] sm:$0xff] %v1577
    %1628 = vst [vmem:[#allocation2 + $0x40] sm:$0xff] %v1582
    %1629 = vst [vmem:[#allocation2 + $0x48] sm:$0xff] %v1587
    %1630 = vst [vmem:[#allocation2 + $0x50] sm:$0xff] %v1592
    %1631 = vst [vmem:[#allocation2 + $0x58] sm:$0xff] %v1597
    %1632 = vst [vmem:[#allocation2 + $0x60] sm:$0xff] %v1602
    %1633 = vst [vmem:[#allocation2 + $0x68] sm:$0xff] %v1607
    %1634 = vst [vmem:[#allocation2 + $0x70] sm:$0xff] %v1612
    %1635 = vst [vmem:[#allocation2 + $0x78] sm:$0xff] %v1617
    // Predicated region
    $region22: #{tpu_custom_call.1} parent=1 // pred_check
      _
    $region23: #{tpu_custom_call.1} parent=1 // pred_check_branch
      %1637 = sbr.rel (0) target = $region25
    $region24: #{tpu_custom_call.1} parent=1 // pred_region
      %s1639 = ssub.s32 2048, 2048
      %1640 = vsyncadd [#allocation3], %s1639
      %s1641 = sshll.u32 [#allocation2], 4
      %s1642 = int_to_ptr.vmem [resolvable:$true] %s1641
      %1647 = dma.vmem_to_hbm [thread:$0]  %s1642, 2048, %s5, [#allocation3], 128, 128, 8
    $region25: #{tpu_custom_call.1} parent=1 // pred_fallthru
      _
    // Predicated region
    $region26: #{tpu_custom_call.1} parent=1 // pred_check
      _
    $region27: #{tpu_custom_call.1} parent=1 // pred_check_branch
      %1649 = sbr.rel (0) target = $region29
    $region28: #{tpu_custom_call.1} parent=1 // pred_region
      %1650 = dma.done [#allocation3], 2048
    $region29: #{tpu_custom_call.1} parent=1 // pred_fallthru
      _
    %1651 = vsyncpa [#allocation3], 1

</llo_original>
